<compile_context>
chip_gen: v7x
topology: tpu7x:2x2x1
jax: 0.10.0
libtpu: 0.0.40
codegen_flags: <defaults>
</compile_context>

<pallas_src>
import numpy as np
import jax
import jax.numpy as jnp
from jax import lax
from jax.experimental import pallas as pl
from jax.experimental.pallas import tpu as pltpu


# ---------------------------------------------------------------------------
# Configuration (small, consistent with the module's forward signature)
# ---------------------------------------------------------------------------
BATCH = 2
SEQ = 8
HIDDEN = 32
NUM_HEADS = 4
HEAD_DIM = HIDDEN // NUM_HEADS
FFN = 4 * HIDDEN                      # ConfiFFN intermediate size (SwiGLU); == 128
LN_EPS = 1e-5
ATTN_SCALE = 1.0 / (HEAD_DIM ** 0.5)
NEG_INF = -1e30


def alibi_slopes(num_heads: int):
    """Standard ALiBi geometric slopes (num_heads is a power of two)."""
    start = 2.0 ** (-8.0 / num_heads)
    return [start ** (h + 1) for h in range(num_heads)]


SLOPES = alibi_slopes(NUM_HEADS)


def _build_attn_bias(batch: int, seq: int) -> np.ndarray:
    """(NUM_HEADS, batch*seq, batch*seq) additive bias folding ALiBi + causal mask +
    cross-batch block-diagonal mask. Pure numpy -> compile-time constant (4 KiB here)."""
    pos = np.arange(seq)
    dist = pos[:, None] - pos[None, :]                                  # i - j
    slopes = np.asarray(SLOPES, np.float32)[:, None, None]
    within = np.where(dist[None] >= 0,
                      -slopes * dist[None].astype(np.float32),
                      np.float32(NEG_INF))                              # (nh, S, S)
    bias = np.full((NUM_HEADS, batch * seq, batch * seq), NEG_INF, np.float32)
    for b in range(batch):
        bias[:, b * seq:(b + 1) * seq, b * seq:(b + 1) * seq] = within
    return bias


# ---------------------------------------------------------------------------
# Pallas kernel: the whole block (all batch elements) in one invocation.
# ---------------------------------------------------------------------------
def _block_kernel(x_ref,
                  wq_ref, wk_ref, wv_ref,        # (NH, H, HD) bf16 (ln1 affine + scale folded)
                  bq_ref, bk_ref, bv_ref,        # (NH, 1, HD) f32 (ln1 affine + scale folded)
                  wo_ref, bo_ref,                # (NH, HD, H) bf16 ; (1, H) f32
                  wgu_ref, bgu_ref,              # (H, 2F) bf16 ; (1, 2F) f32
                  wd_ref, bd_ref,                # (F, H) bf16 ; (1, H) f32
                  bias_ref,                      # (NH, T, T) f32
                  o_ref):
    x = x_ref[...].astype(jnp.float32)                      # (T, H)

    # ---- LayerNorm 1 (per token, over hidden). gamma/beta are folded into the
    #      q/k/v projection weights host-side, so only the normalization is done here.
    mu = jnp.mean(x, axis=-1, keepdims=True)
    var = jnp.mean((x - mu) ** 2, axis=-1, keepdims=True)
    n = (x - mu) * lax.rsqrt(var + LN_EPS)                   # (T, H) f32
    nb = n.astype(jnp.bfloat16)                              # bf16 MXU operand

    # ---- Attention: all batch rows per head; bias_ref holds ALiBi + causal +
    #      cross-batch block-diagonal mask (host precomputed). Per-head weights are
    #      leading-axis indexed (no lane slices); head outputs are accumulated
    #      through wo_ref[h] (no lane concatenate). ATTN_SCALE is folded into wq/bq.
    attn = None
    for h in range(NUM_HEADS):
        qh = jnp.dot(nb, wq_ref[h], preferred_element_type=jnp.float32) + bq_ref[h]
        kh = jnp.dot(nb, wk_ref[h], preferred_element_type=jnp.float32) + bk_ref[h]
        vh = jnp.dot(nb, wv_ref[h], preferred_element_type=jnp.float32) + bv_ref[h]
        # NT-form score matmul: contract last dim of both operands (no explicit k^T).
        s = lax.dot_general(qh.astype(jnp.bfloat16), kh.astype(jnp.bfloat16),
                            dimension_numbers=(((1,), (1,)), ((), ())),
                            preferred_element_type=jnp.float32)          # (T, T)
        s = s + bias_ref[h]
        s = s - jnp.max(s, axis=-1, keepdims=True)
        p = jnp.exp(s)
        p = p * pl.reciprocal(jnp.sum(p, axis=-1, keepdims=True), approx=True)
        hout = jnp.dot(p.astype(jnp.bfloat16), vh.astype(jnp.bfloat16),
                       preferred_element_type=jnp.float32)               # (T, HD)
        contrib = jnp.dot(hout.astype(jnp.bfloat16), wo_ref[h],
                          preferred_element_type=jnp.float32)            # (T, H)
        attn = contrib if attn is None else attn + contrib

    # ---- First residual ------------------------------------------------------
    x = x + attn + bo_ref[...]

    # ---- ConfiFFN (SwiGLU) with fused gate+up projection; split at lane 128 --
    xb = x.astype(jnp.bfloat16)
    gu = jnp.dot(xb, wgu_ref[...], preferred_element_type=jnp.float32) + bgu_ref[...]
    g = gu[:, :FFN]
    u = gu[:, FFN:]
    hsw = (g * jax.nn.sigmoid(g)) * u                        # silu(gate) * up, f32
    d = jnp.dot(hsw.astype(jnp.bfloat16), wd_ref[...],
                preferred_element_type=jnp.float32) + bd_ref[...]

    # ---- Second residual + write --------------------------------------------
    o_ref[...] = (x + d).astype(o_ref.dtype)
    # TODO(synk): attn/mlp dropout omitted (eval-mode identity); layer_cache not supported.


# ---------------------------------------------------------------------------
# Wrapper (no grid: whole-array VMEM blocks, no pipeline scaffolding)
# ---------------------------------------------------------------------------
_VMEM_SPEC = pl.BlockSpec(memory_space=pltpu.MemorySpace.VMEM)


@jax.jit
def alibi_confit_block(x, pk):
    B, S, H = x.shape
    assert (S, H) == (SEQ, HIDDEN)
    T = B * S
    x2d = x.reshape(T, H)

    bias = jnp.asarray(_build_attn_bias(B, S))               # compile-time constant

    operands = (x2d,
                pk["wq"], pk["wk"], pk["wv"],
                pk["bq"], pk["bk"], pk["bv"],
                pk["wo"], pk["bo"],
                pk["wgu"], pk["bgu"],
                pk["wd"], pk["bd"],
                bias)

    # Advisory cost estimate (matmul flops; exp/sigmoid/rsqrt/recip transcendentals).
    flops = (NUM_HEADS * (3 * 2 * T * H * HEAD_DIM           # q, k, v per head
                          + 2 * (2 * T * T * HEAD_DIM)       # scores + p@v
                          + 2 * T * HEAD_DIM * H)            # per-head out projection
             + 2 * T * H * (2 * FFN)                         # fused gate+up
             + 2 * T * FFN * H)                              # down projection
    transcendentals = NUM_HEADS * T * T + NUM_HEADS * T + T * FFN + T
    bytes_accessed = sum(int(op.size) * op.dtype.itemsize for op in operands) \
        + T * H * x.dtype.itemsize

    out2d = pl.pallas_call(
        _block_kernel,
        out_shape=jax.ShapeDtypeStruct((T, H), x.dtype),
        in_specs=[_VMEM_SPEC] * len(operands),
        out_specs=_VMEM_SPEC,
        cost_estimate=pl.CostEstimate(
            flops=flops,
            transcendentals=transcendentals,
            bytes_accessed=bytes_accessed),
    )(*operands)
    return out2d.reshape(B, S, H)


def pack_params(p):
    """Host-side packing done once:
       - fold ln1 gamma/beta into the q/k/v projections (y is only used there),
       - fold ATTN_SCALE into wq/bq,
       - repack q/k/v weights per head (NH, H, HD) and wo per head (NH, HD, H),
       - fuse gate+up weights/biases,
       - cast all matmul weights to bf16 (biases stay f32)."""
    gamma = p["ln1_g"].reshape(HIDDEN, 1)                    # (H, 1)
    beta = p["ln1_b"]                                        # (1, H)

    def fold_ln(w, b):
        return gamma * w, beta @ w + b                       # (H, H), (1, H)

    wq, bq = fold_ln(p["wq"], p["bq"])
    wk, bk = fold_ln(p["wk"], p["bk"])
    wv, bv = fold_ln(p["wv"], p["bv"])
    wq = wq * ATTN_SCALE
    bq = bq * ATTN_SCALE

    def per_head_w(w):   # (H, H) -> (NH, H, HD)
        return jnp.transpose(w.reshape(HIDDEN, NUM_HEADS, HEAD_DIM), (1, 0, 2))

    def per_head_b(b):   # (1, H) -> (NH, 1, HD)
        return b.reshape(NUM_HEADS, 1, HEAD_DIM)

    bf = lambda a: a.astype(jnp.bfloat16)
    return {
        "wq": bf(per_head_w(wq)), "wk": bf(per_head_w(wk)), "wv": bf(per_head_w(wv)),
        "bq": per_head_b(bq), "bk": per_head_b(bk), "bv": per_head_b(bv),
        "wo": bf(p["wo"].reshape(NUM_HEADS, HEAD_DIM, HIDDEN)),
        "bo": p["bo"],
        "wgu": bf(jnp.concatenate([p["wg"], p["wu"]], axis=1)),   # (H, 2*FFN)
        "bgu": jnp.concatenate([p["bg"], p["bu"]], axis=1),       # (1, 2*FFN)
        "wd": bf(p["wd"]),
        "bd": p["bd"],
    }


# ---------------------------------------------------------------------------
# Pure-JAX reference (same math, full f32) for correctness checking
# ---------------------------------------------------------------------------
def reference(x, p):
    mu = x.mean(-1, keepdims=True)
    var = ((x - mu) ** 2).mean(-1, keepdims=True)
    y = (x - mu) / jnp.sqrt(var + LN_EPS) * p["ln1_g"] + p["ln1_b"]

    q = y @ p["wq"] + p["bq"]
    k = y @ p["wk"] + p["bk"]
    v = y @ p["wv"] + p["bv"]
    B, S, H = x.shape
    rs = lambda t: t.reshape(B, S, NUM_HEADS, HEAD_DIM).transpose(0, 2, 1, 3)
    q, k, v = rs(q), rs(k), rs(v)                                    # (B, nh, S, hd)

    scores = jnp.einsum("bhqd,bhkd->bhqk", q, k) * ATTN_SCALE
    row = jnp.arange(S)[:, None]
    col = jnp.arange(S)[None, :]
    dist = (row - col).astype(jnp.float32)
    slopes = jnp.asarray(SLOPES, jnp.float32)[None, :, None, None]
    scores = scores - slopes * dist[None, None]
    scores = jnp.where((col <= row)[None, None], scores, NEG_INF)
    probs = jax.nn.softmax(scores, axis=-1)
    out = jnp.einsum("bhqk,bhkd->bhqd", probs, v)
    out = out.transpose(0, 2, 1, 3).reshape(B, S, H)
    x = x + (out @ p["wo"] + p["bo"])

    g = x @ p["wg"] + p["bg"]
    u = x @ p["wu"] + p["bu"]
    x = x + ((g * jax.nn.sigmoid(g)) * u) @ p["wd"] + p["bd"]
    return x


# ---------------------------------------------------------------------------
# Deterministic parameter init + run
# ---------------------------------------------------------------------------
def init_params(key):
    ks = jax.random.split(key, 9)
    init = lambda k, shape: (0.02 * jax.random.normal(k, shape)).astype(jnp.float32)
    return {
        "ln1_g": jnp.ones((1, HIDDEN), jnp.float32),
        "ln1_b": jnp.zeros((1, HIDDEN), jnp.float32),
        "wq": init(ks[0], (HIDDEN, HIDDEN)),
        "wk": init(ks[1], (HIDDEN, HIDDEN)),
        "wv": init(ks[2], (HIDDEN, HIDDEN)),
        "bq": jnp.zeros((1, HIDDEN), jnp.float32),
        "bk": jnp.zeros((1, HIDDEN), jnp.float32),
        "bv": jnp.zeros((1, HIDDEN), jnp.float32),
        "wo": init(ks[3], (HIDDEN, HIDDEN)),
        "bo": init(ks[4], (1, HIDDEN)),
        "wg": init(ks[5], (HIDDEN, FFN)),
        "bg": jnp.zeros((1, FFN), jnp.float32),
        "wu": init(ks[6], (HIDDEN, FFN)),
        "bu": jnp.zeros((1, FFN), jnp.float32),
        "wd": init(ks[7], (FFN, HIDDEN)),
        "bd": init(ks[8], (1, HIDDEN)),
    }


if __name__ == "__main__":
    key = jax.random.PRNGKey(0)
    k_x, k_p = jax.random.split(key)
    x = jax.random.normal(k_x, (BATCH, SEQ, HIDDEN), jnp.float32)
    params = init_params(k_p)
    packed = pack_params(params)

    out = alibi_confit_block(x, packed)
    out = jax.block_until_ready(out)

    ref = reference(x, params)
    assert out.shape == (BATCH, SEQ, HIDDEN)
    # bf16 MXU inputs + approx reciprocal -> slightly looser tolerance than pure-f32.
    assert jnp.allclose(out, ref, atol=5e-3, rtol=5e-3), float(jnp.max(jnp.abs(out - ref)))

    print("KERNEL_OK")
</pallas_src>

<mosaic_0001>
module attributes {stable_mosaic.version = 11 : i64} {
  func.func @_block_kernel(%arg0: memref<16x32xf32, #tpu.memory_space<vmem>>, %arg1: memref<4x32x8xbf16, #tpu.memory_space<vmem>>, %arg2: memref<4x32x8xbf16, #tpu.memory_space<vmem>>, %arg3: memref<4x32x8xbf16, #tpu.memory_space<vmem>>, %arg4: memref<4x1x8xf32, #tpu.memory_space<vmem>>, %arg5: memref<4x1x8xf32, #tpu.memory_space<vmem>>, %arg6: memref<4x1x8xf32, #tpu.memory_space<vmem>>, %arg7: memref<4x8x32xbf16, #tpu.memory_space<vmem>>, %arg8: memref<1x32xf32, #tpu.memory_space<vmem>>, %arg9: memref<32x256xbf16, #tpu.memory_space<vmem>>, %arg10: memref<1x256xf32, #tpu.memory_space<vmem>>, %arg11: memref<128x32xbf16, #tpu.memory_space<vmem>>, %arg12: memref<1x32xf32, #tpu.memory_space<vmem>>, %arg13: memref<4x16x16xf32, #tpu.memory_space<vmem>>, %arg14: memref<16x32xf32, #tpu.memory_space<vmem>>) attributes {dimension_semantics = [], scalar_prefetch = 0 : i64, scratch_operands = 0 : i64, tpu.core_type = #tpu.core_type<tc>} {
    %c0 = arith.constant 0 : index
    %c0_0 = arith.constant 0 : index
    %0 = vector.load %arg0[%c0, %c0_0] : memref<16x32xf32, #tpu.memory_space<vmem>>, vector<16x32xf32>
    %cst = arith.constant dense<0.000000e+00> : vector<16xf32>
    %1 = vector.multi_reduction <add>, %0, %cst [1] : vector<16x32xf32> to vector<16xf32>
    %2 = vector.shape_cast %1 : vector<16xf32> to vector<16x1xf32>
    %cst_1 = arith.constant 3.200000e+01 : f32
    %3 = vector.broadcast %cst_1 : f32 to vector<16x1xf32>
    %4 = arith.divf %2, %3 : vector<16x1xf32>
    %5 = vector.broadcast %4 : vector<16x1xf32> to vector<16x32xf32>
    %6 = arith.subf %0, %5 : vector<16x32xf32>
    %7 = arith.mulf %6, %6 : vector<16x32xf32>
    %cst_2 = arith.constant dense<0.000000e+00> : vector<16xf32>
    %8 = vector.multi_reduction <add>, %7, %cst_2 [1] : vector<16x32xf32> to vector<16xf32>
    %9 = vector.shape_cast %8 : vector<16xf32> to vector<16x1xf32>
    %cst_3 = arith.constant 3.200000e+01 : f32
    %10 = vector.broadcast %cst_3 : f32 to vector<16x1xf32>
    %11 = arith.divf %9, %10 : vector<16x1xf32>
    %12 = vector.broadcast %4 : vector<16x1xf32> to vector<16x32xf32>
    %13 = arith.subf %0, %12 : vector<16x32xf32>
    %cst_4 = arith.constant 9.99999974E-6 : f32
    %14 = vector.broadcast %cst_4 : f32 to vector<16x1xf32>
    %15 = arith.addf %11, %14 : vector<16x1xf32>
    %16 = math.rsqrt %15 : vector<16x1xf32>
    %17 = vector.broadcast %16 : vector<16x1xf32> to vector<16x32xf32>
    %18 = arith.mulf %13, %17 : vector<16x32xf32>
    %19 = arith.truncf %18 : vector<16x32xf32> to vector<16x32xbf16>
    %c0_5 = arith.constant 0 : index
    %c0_6 = arith.constant 0 : index
    %c0_7 = arith.constant 0 : index
    %20 = vector.load %arg1[%c0_5, %c0_6, %c0_7] : memref<4x32x8xbf16, #tpu.memory_space<vmem>>, vector<1x32x8xbf16>
    %21 = vector.shape_cast %20 : vector<1x32x8xbf16> to vector<32x8xbf16>
    %cst_8 = arith.constant dense<0.000000e+00> : vector<16x8xf32>
    %22 = tpu.matmul %19, %21, %cst_8 {dimension_numbers = #tpu.dot_dimension_numbers<[1], [0], [0], [1], [0, 0, 1, 1], [], []>} : vector<16x32xbf16>, vector<32x8xbf16>, vector<16x8xf32> -> vector<16x8xf32>
    %c0_9 = arith.constant 0 : index
    %c0_10 = arith.constant 0 : index
    %c0_11 = arith.constant 0 : index
    %23 = vector.load %arg4[%c0_9, %c0_10, %c0_11] : memref<4x1x8xf32, #tpu.memory_space<vmem>>, vector<1x1x8xf32>
    %24 = vector.shape_cast %23 : vector<1x1x8xf32> to vector<1x8xf32>
    %25 = vector.broadcast %24 : vector<1x8xf32> to vector<16x8xf32>
    %26 = arith.addf %22, %25 : vector<16x8xf32>
    %c0_12 = arith.constant 0 : index
    %c0_13 = arith.constant 0 : index
    %c0_14 = arith.constant 0 : index
    %27 = vector.load %arg2[%c0_12, %c0_13, %c0_14] : memref<4x32x8xbf16, #tpu.memory_space<vmem>>, vector<1x32x8xbf16>
    %28 = vector.shape_cast %27 : vector<1x32x8xbf16> to vector<32x8xbf16>
    %cst_15 = arith.constant dense<0.000000e+00> : vector<16x8xf32>
    %29 = tpu.matmul %19, %28, %cst_15 {dimension_numbers = #tpu.dot_dimension_numbers<[1], [0], [0], [1], [0, 0, 1, 1], [], []>} : vector<16x32xbf16>, vector<32x8xbf16>, vector<16x8xf32> -> vector<16x8xf32>
    %c0_16 = arith.constant 0 : index
    %c0_17 = arith.constant 0 : index
    %c0_18 = arith.constant 0 : index
    %30 = vector.load %arg5[%c0_16, %c0_17, %c0_18] : memref<4x1x8xf32, #tpu.memory_space<vmem>>, vector<1x1x8xf32>
    %31 = vector.shape_cast %30 : vector<1x1x8xf32> to vector<1x8xf32>
    %32 = vector.broadcast %31 : vector<1x8xf32> to vector<16x8xf32>
    %33 = arith.addf %29, %32 : vector<16x8xf32>
    %c0_19 = arith.constant 0 : index
    %c0_20 = arith.constant 0 : index
    %c0_21 = arith.constant 0 : index
    %34 = vector.load %arg3[%c0_19, %c0_20, %c0_21] : memref<4x32x8xbf16, #tpu.memory_space<vmem>>, vector<1x32x8xbf16>
    %35 = vector.shape_cast %34 : vector<1x32x8xbf16> to vector<32x8xbf16>
    %cst_22 = arith.constant dense<0.000000e+00> : vector<16x8xf32>
    %36 = tpu.matmul %19, %35, %cst_22 {dimension_numbers = #tpu.dot_dimension_numbers<[1], [0], [0], [1], [0, 0, 1, 1], [], []>} : vector<16x32xbf16>, vector<32x8xbf16>, vector<16x8xf32> -> vector<16x8xf32>
    %c0_23 = arith.constant 0 : index
    %c0_24 = arith.constant 0 : index
    %c0_25 = arith.constant 0 : index
    %37 = vector.load %arg6[%c0_23, %c0_24, %c0_25] : memref<4x1x8xf32, #tpu.memory_space<vmem>>, vector<1x1x8xf32>
    %38 = vector.shape_cast %37 : vector<1x1x8xf32> to vector<1x8xf32>
    %39 = vector.broadcast %38 : vector<1x8xf32> to vector<16x8xf32>
    %40 = arith.addf %36, %39 : vector<16x8xf32>
    %41 = arith.truncf %26 : vector<16x8xf32> to vector<16x8xbf16>
    %42 = arith.truncf %33 : vector<16x8xf32> to vector<16x8xbf16>
    %cst_26 = arith.constant dense<0.000000e+00> : vector<16x16xf32>
    %43 = tpu.matmul %41, %42, %cst_26 {dimension_numbers = #tpu.dot_dimension_numbers<[1], [1], [0], [0], [0, 0, 1, 0], [], []>} : vector<16x8xbf16>, vector<16x8xbf16>, vector<16x16xf32> -> vector<16x16xf32>
    %c0_27 = arith.constant 0 : index
    %c0_28 = arith.constant 0 : index
    %c0_29 = arith.constant 0 : index
    %44 = vector.load %arg13[%c0_27, %c0_28, %c0_29] : memref<4x16x16xf32, #tpu.memory_space<vmem>>, vector<1x16x16xf32>
    %45 = vector.shape_cast %44 : vector<1x16x16xf32> to vector<16x16xf32>
    %46 = arith.addf %43, %45 : vector<16x16xf32>
    %cst_30 = arith.constant dense<0xFF800000> : vector<16xf32>
    %47 = vector.multi_reduction <maximumf>, %46, %cst_30 [1] : vector<16x16xf32> to vector<16xf32>
    %48 = vector.shape_cast %47 : vector<16xf32> to vector<16x1xf32>
    %49 = vector.broadcast %48 : vector<16x1xf32> to vector<16x16xf32>
    %50 = arith.subf %46, %49 : vector<16x16xf32>
    %51 = math.exp %50 : vector<16x16xf32>
    %cst_31 = arith.constant dense<0.000000e+00> : vector<16xf32>
    %52 = vector.multi_reduction <add>, %51, %cst_31 [1] : vector<16x16xf32> to vector<16xf32>
    %53 = vector.shape_cast %52 : vector<16xf32> to vector<16x1xf32>
    %54 = tpu.reciprocal %53 {approx = true} : vector<16x1xf32> -> vector<16x1xf32>
    %55 = vector.broadcast %54 : vector<16x1xf32> to vector<16x16xf32>
    %56 = arith.mulf %51, %55 : vector<16x16xf32>
    %57 = arith.truncf %56 : vector<16x16xf32> to vector<16x16xbf16>
    %58 = arith.truncf %40 : vector<16x8xf32> to vector<16x8xbf16>
    %cst_32 = arith.constant dense<0.000000e+00> : vector<16x8xf32>
    %59 = tpu.matmul %57, %58, %cst_32 {dimension_numbers = #tpu.dot_dimension_numbers<[1], [0], [0], [1], [0, 0, 1, 1], [], []>} : vector<16x16xbf16>, vector<16x8xbf16>, vector<16x8xf32> -> vector<16x8xf32>
    %60 = arith.truncf %59 : vector<16x8xf32> to vector<16x8xbf16>
    %c0_33 = arith.constant 0 : index
    %c0_34 = arith.constant 0 : index
    %c0_35 = arith.constant 0 : index
    %61 = vector.load %arg7[%c0_33, %c0_34, %c0_35] : memref<4x8x32xbf16, #tpu.memory_space<vmem>>, vector<1x8x32xbf16>
    %62 = vector.shape_cast %61 : vector<1x8x32xbf16> to vector<8x32xbf16>
    %cst_36 = arith.constant dense<0.000000e+00> : vector<16x32xf32>
    %63 = tpu.matmul %60, %62, %cst_36 {dimension_numbers = #tpu.dot_dimension_numbers<[1], [0], [0], [1], [0, 0, 1, 1], [], []>} : vector<16x8xbf16>, vector<8x32xbf16>, vector<16x32xf32> -> vector<16x32xf32>
    %c1 = arith.constant 1 : index
    %c0_37 = arith.constant 0 : index
    %c0_38 = arith.constant 0 : index
    %64 = vector.load %arg1[%c1, %c0_37, %c0_38] : memref<4x32x8xbf16, #tpu.memory_space<vmem>>, vector<1x32x8xbf16>
    %65 = vector.shape_cast %64 : vector<1x32x8xbf16> to vector<32x8xbf16>
    %cst_39 = arith.constant dense<0.000000e+00> : vector<16x8xf32>
    %66 = tpu.matmul %19, %65, %cst_39 {dimension_numbers = #tpu.dot_dimension_numbers<[1], [0], [0], [1], [0, 0, 1, 1], [], []>} : vector<16x32xbf16>, vector<32x8xbf16>, vector<16x8xf32> -> vector<16x8xf32>
    %c1_40 = arith.constant 1 : index
    %c0_41 = arith.constant 0 : index
    %c0_42 = arith.constant 0 : index
    %67 = vector.load %arg4[%c1_40, %c0_41, %c0_42] : memref<4x1x8xf32, #tpu.memory_space<vmem>>, vector<1x1x8xf32>
    %68 = vector.shape_cast %67 : vector<1x1x8xf32> to vector<1x8xf32>
    %69 = vector.broadcast %68 : vector<1x8xf32> to vector<16x8xf32>
    %70 = arith.addf %66, %69 : vector<16x8xf32>
    %c1_43 = arith.constant 1 : index
    %c0_44 = arith.constant 0 : index
    %c0_45 = arith.constant 0 : index
    %71 = vector.load %arg2[%c1_43, %c0_44, %c0_45] : memref<4x32x8xbf16, #tpu.memory_space<vmem>>, vector<1x32x8xbf16>
    %72 = vector.shape_cast %71 : vector<1x32x8xbf16> to vector<32x8xbf16>
    %cst_46 = arith.constant dense<0.000000e+00> : vector<16x8xf32>
    %73 = tpu.matmul %19, %72, %cst_46 {dimension_numbers = #tpu.dot_dimension_numbers<[1], [0], [0], [1], [0, 0, 1, 1], [], []>} : vector<16x32xbf16>, vector<32x8xbf16>, vector<16x8xf32> -> vector<16x8xf32>
    %c1_47 = arith.constant 1 : index
    %c0_48 = arith.constant 0 : index
    %c0_49 = arith.constant 0 : index
    %74 = vector.load %arg5[%c1_47, %c0_48, %c0_49] : memref<4x1x8xf32, #tpu.memory_space<vmem>>, vector<1x1x8xf32>
    %75 = vector.shape_cast %74 : vector<1x1x8xf32> to vector<1x8xf32>
    %76 = vector.broadcast %75 : vector<1x8xf32> to vector<16x8xf32>
    %77 = arith.addf %73, %76 : vector<16x8xf32>
    %c1_50 = arith.constant 1 : index
    %c0_51 = arith.constant 0 : index
    %c0_52 = arith.constant 0 : index
    %78 = vector.load %arg3[%c1_50, %c0_51, %c0_52] : memref<4x32x8xbf16, #tpu.memory_space<vmem>>, vector<1x32x8xbf16>
    %79 = vector.shape_cast %78 : vector<1x32x8xbf16> to vector<32x8xbf16>
    %cst_53 = arith.constant dense<0.000000e+00> : vector<16x8xf32>
    %80 = tpu.matmul %19, %79, %cst_53 {dimension_numbers = #tpu.dot_dimension_numbers<[1], [0], [0], [1], [0, 0, 1, 1], [], []>} : vector<16x32xbf16>, vector<32x8xbf16>, vector<16x8xf32> -> vector<16x8xf32>
    %c1_54 = arith.constant 1 : index
    %c0_55 = arith.constant 0 : index
    %c0_56 = arith.constant 0 : index
    %81 = vector.load %arg6[%c1_54, %c0_55, %c0_56] : memref<4x1x8xf32, #tpu.memory_space<vmem>>, vector<1x1x8xf32>
    %82 = vector.shape_cast %81 : vector<1x1x8xf32> to vector<1x8xf32>
    %83 = vector.broadcast %82 : vector<1x8xf32> to vector<16x8xf32>
    %84 = arith.addf %80, %83 : vector<16x8xf32>
    %85 = arith.truncf %70 : vector<16x8xf32> to vector<16x8xbf16>
    %86 = arith.truncf %77 : vector<16x8xf32> to vector<16x8xbf16>
    %cst_57 = arith.constant dense<0.000000e+00> : vector<16x16xf32>
    %87 = tpu.matmul %85, %86, %cst_57 {dimension_numbers = #tpu.dot_dimension_numbers<[1], [1], [0], [0], [0, 0, 1, 0], [], []>} : vector<16x8xbf16>, vector<16x8xbf16>, vector<16x16xf32> -> vector<16x16xf32>
    %c1_58 = arith.constant 1 : index
    %c0_59 = arith.constant 0 : index
    %c0_60 = arith.constant 0 : index
    %88 = vector.load %arg13[%c1_58, %c0_59, %c0_60] : memref<4x16x16xf32, #tpu.memory_space<vmem>>, vector<1x16x16xf32>
    %89 = vector.shape_cast %88 : vector<1x16x16xf32> to vector<16x16xf32>
    %90 = arith.addf %87, %89 : vector<16x16xf32>
    %cst_61 = arith.constant dense<0xFF800000> : vector<16xf32>
    %91 = vector.multi_reduction <maximumf>, %90, %cst_61 [1] : vector<16x16xf32> to vector<16xf32>
    %92 = vector.shape_cast %91 : vector<16xf32> to vector<16x1xf32>
    %93 = vector.broadcast %92 : vector<16x1xf32> to vector<16x16xf32>
    %94 = arith.subf %90, %93 : vector<16x16xf32>
    %95 = math.exp %94 : vector<16x16xf32>
    %cst_62 = arith.constant dense<0.000000e+00> : vector<16xf32>
    %96 = vector.multi_reduction <add>, %95, %cst_62 [1] : vector<16x16xf32> to vector<16xf32>
    %97 = vector.shape_cast %96 : vector<16xf32> to vector<16x1xf32>
    %98 = tpu.reciprocal %97 {approx = true} : vector<16x1xf32> -> vector<16x1xf32>
    %99 = vector.broadcast %98 : vector<16x1xf32> to vector<16x16xf32>
    %100 = arith.mulf %95, %99 : vector<16x16xf32>
    %101 = arith.truncf %100 : vector<16x16xf32> to vector<16x16xbf16>
    %102 = arith.truncf %84 : vector<16x8xf32> to vector<16x8xbf16>
    %cst_63 = arith.constant dense<0.000000e+00> : vector<16x8xf32>
    %103 = tpu.matmul %101, %102, %cst_63 {dimension_numbers = #tpu.dot_dimension_numbers<[1], [0], [0], [1], [0, 0, 1, 1], [], []>} : vector<16x16xbf16>, vector<16x8xbf16>, vector<16x8xf32> -> vector<16x8xf32>
    %104 = arith.truncf %103 : vector<16x8xf32> to vector<16x8xbf16>
    %c1_64 = arith.constant 1 : index
    %c0_65 = arith.constant 0 : index
    %c0_66 = arith.constant 0 : index
    %105 = vector.load %arg7[%c1_64, %c0_65, %c0_66] : memref<4x8x32xbf16, #tpu.memory_space<vmem>>, vector<1x8x32xbf16>
    %106 = vector.shape_cast %105 : vector<1x8x32xbf16> to vector<8x32xbf16>
    %cst_67 = arith.constant dense<0.000000e+00> : vector<16x32xf32>
    %107 = tpu.matmul %104, %106, %cst_67 {dimension_numbers = #tpu.dot_dimension_numbers<[1], [0], [0], [1], [0, 0, 1, 1], [], []>} : vector<16x8xbf16>, vector<8x32xbf16>, vector<16x32xf32> -> vector<16x32xf32>
    %108 = arith.addf %63, %107 : vector<16x32xf32>
    %c2 = arith.constant 2 : index
    %c0_68 = arith.constant 0 : index
    %c0_69 = arith.constant 0 : index
    %109 = vector.load %arg1[%c2, %c0_68, %c0_69] : memref<4x32x8xbf16, #tpu.memory_space<vmem>>, vector<1x32x8xbf16>
    %110 = vector.shape_cast %109 : vector<1x32x8xbf16> to vector<32x8xbf16>
    %cst_70 = arith.constant dense<0.000000e+00> : vector<16x8xf32>
    %111 = tpu.matmul %19, %110, %cst_70 {dimension_numbers = #tpu.dot_dimension_numbers<[1], [0], [0], [1], [0, 0, 1, 1], [], []>} : vector<16x32xbf16>, vector<32x8xbf16>, vector<16x8xf32> -> vector<16x8xf32>
    %c2_71 = arith.constant 2 : index
    %c0_72 = arith.constant 0 : index
    %c0_73 = arith.constant 0 : index
    %112 = vector.load %arg4[%c2_71, %c0_72, %c0_73] : memref<4x1x8xf32, #tpu.memory_space<vmem>>, vector<1x1x8xf32>
    %113 = vector.shape_cast %112 : vector<1x1x8xf32> to vector<1x8xf32>
    %114 = vector.broadcast %113 : vector<1x8xf32> to vector<16x8xf32>
    %115 = arith.addf %111, %114 : vector<16x8xf32>
    %c2_74 = arith.constant 2 : index
    %c0_75 = arith.constant 0 : index
    %c0_76 = arith.constant 0 : index
    %116 = vector.load %arg2[%c2_74, %c0_75, %c0_76] : memref<4x32x8xbf16, #tpu.memory_space<vmem>>, vector<1x32x8xbf16>
    %117 = vector.shape_cast %116 : vector<1x32x8xbf16> to vector<32x8xbf16>
    %cst_77 = arith.constant dense<0.000000e+00> : vector<16x8xf32>
    %118 = tpu.matmul %19, %117, %cst_77 {dimension_numbers = #tpu.dot_dimension_numbers<[1], [0], [0], [1], [0, 0, 1, 1], [], []>} : vector<16x32xbf16>, vector<32x8xbf16>, vector<16x8xf32> -> vector<16x8xf32>
    %c2_78 = arith.constant 2 : index
    %c0_79 = arith.constant 0 : index
    %c0_80 = arith.constant 0 : index
    %119 = vector.load %arg5[%c2_78, %c0_79, %c0_80] : memref<4x1x8xf32, #tpu.memory_space<vmem>>, vector<1x1x8xf32>
    %120 = vector.shape_cast %119 : vector<1x1x8xf32> to vector<1x8xf32>
    %121 = vector.broadcast %120 : vector<1x8xf32> to vector<16x8xf32>
    %122 = arith.addf %118, %121 : vector<16x8xf32>
    %c2_81 = arith.constant 2 : index
    %c0_82 = arith.constant 0 : index
    %c0_83 = arith.constant 0 : index
    %123 = vector.load %arg3[%c2_81, %c0_82, %c0_83] : memref<4x32x8xbf16, #tpu.memory_space<vmem>>, vector<1x32x8xbf16>
    %124 = vector.shape_cast %123 : vector<1x32x8xbf16> to vector<32x8xbf16>
    %cst_84 = arith.constant dense<0.000000e+00> : vector<16x8xf32>
    %125 = tpu.matmul %19, %124, %cst_84 {dimension_numbers = #tpu.dot_dimension_numbers<[1], [0], [0], [1], [0, 0, 1, 1], [], []>} : vector<16x32xbf16>, vector<32x8xbf16>, vector<16x8xf32> -> vector<16x8xf32>
    %c2_85 = arith.constant 2 : index
    %c0_86 = arith.constant 0 : index
    %c0_87 = arith.constant 0 : index
    %126 = vector.load %arg6[%c2_85, %c0_86, %c0_87] : memref<4x1x8xf32, #tpu.memory_space<vmem>>, vector<1x1x8xf32>
    %127 = vector.shape_cast %126 : vector<1x1x8xf32> to vector<1x8xf32>
    %128 = vector.broadcast %127 : vector<1x8xf32> to vector<16x8xf32>
    %129 = arith.addf %125, %128 : vector<16x8xf32>
    %130 = arith.truncf %115 : vector<16x8xf32> to vector<16x8xbf16>
    %131 = arith.truncf %122 : vector<16x8xf32> to vector<16x8xbf16>
    %cst_88 = arith.constant dense<0.000000e+00> : vector<16x16xf32>
    %132 = tpu.matmul %130, %131, %cst_88 {dimension_numbers = #tpu.dot_dimension_numbers<[1], [1], [0], [0], [0, 0, 1, 0], [], []>} : vector<16x8xbf16>, vector<16x8xbf16>, vector<16x16xf32> -> vector<16x16xf32>
    %c2_89 = arith.constant 2 : index
    %c0_90 = arith.constant 0 : index
    %c0_91 = arith.constant 0 : index
    %133 = vector.load %arg13[%c2_89, %c0_90, %c0_91] : memref<4x16x16xf32, #tpu.memory_space<vmem>>, vector<1x16x16xf32>
    %134 = vector.shape_cast %133 : vector<1x16x16xf32> to vector<16x16xf32>
    %135 = arith.addf %132, %134 : vector<16x16xf32>
    %cst_92 = arith.constant dense<0xFF800000> : vector<16xf32>
    %136 = vector.multi_reduction <maximumf>, %135, %cst_92 [1] : vector<16x16xf32> to vector<16xf32>
    %137 = vector.shape_cast %136 : vector<16xf32> to vector<16x1xf32>
    %138 = vector.broadcast %137 : vector<16x1xf32> to vector<16x16xf32>
    %139 = arith.subf %135, %138 : vector<16x16xf32>
    %140 = math.exp %139 : vector<16x16xf32>
    %cst_93 = arith.constant dense<0.000000e+00> : vector<16xf32>
    %141 = vector.multi_reduction <add>, %140, %cst_93 [1] : vector<16x16xf32> to vector<16xf32>
    %142 = vector.shape_cast %141 : vector<16xf32> to vector<16x1xf32>
    %143 = tpu.reciprocal %142 {approx = true} : vector<16x1xf32> -> vector<16x1xf32>
    %144 = vector.broadcast %143 : vector<16x1xf32> to vector<16x16xf32>
    %145 = arith.mulf %140, %144 : vector<16x16xf32>
    %146 = arith.truncf %145 : vector<16x16xf32> to vector<16x16xbf16>
    %147 = arith.truncf %129 : vector<16x8xf32> to vector<16x8xbf16>
    %cst_94 = arith.constant dense<0.000000e+00> : vector<16x8xf32>
    %148 = tpu.matmul %146, %147, %cst_94 {dimension_numbers = #tpu.dot_dimension_numbers<[1], [0], [0], [1], [0, 0, 1, 1], [], []>} : vector<16x16xbf16>, vector<16x8xbf16>, vector<16x8xf32> -> vector<16x8xf32>
    %149 = arith.truncf %148 : vector<16x8xf32> to vector<16x8xbf16>
    %c2_95 = arith.constant 2 : index
    %c0_96 = arith.constant 0 : index
    %c0_97 = arith.constant 0 : index
    %150 = vector.load %arg7[%c2_95, %c0_96, %c0_97] : memref<4x8x32xbf16, #tpu.memory_space<vmem>>, vector<1x8x32xbf16>
    %151 = vector.shape_cast %150 : vector<1x8x32xbf16> to vector<8x32xbf16>
    %cst_98 = arith.constant dense<0.000000e+00> : vector<16x32xf32>
    %152 = tpu.matmul %149, %151, %cst_98 {dimension_numbers = #tpu.dot_dimension_numbers<[1], [0], [0], [1], [0, 0, 1, 1], [], []>} : vector<16x8xbf16>, vector<8x32xbf16>, vector<16x32xf32> -> vector<16x32xf32>
    %153 = arith.addf %108, %152 : vector<16x32xf32>
    %c3 = arith.constant 3 : index
    %c0_99 = arith.constant 0 : index
    %c0_100 = arith.constant 0 : index
    %154 = vector.load %arg1[%c3, %c0_99, %c0_100] : memref<4x32x8xbf16, #tpu.memory_space<vmem>>, vector<1x32x8xbf16>
    %155 = vector.shape_cast %154 : vector<1x32x8xbf16> to vector<32x8xbf16>
    %cst_101 = arith.constant dense<0.000000e+00> : vector<16x8xf32>
    %156 = tpu.matmul %19, %155, %cst_101 {dimension_numbers = #tpu.dot_dimension_numbers<[1], [0], [0], [1], [0, 0, 1, 1], [], []>} : vector<16x32xbf16>, vector<32x8xbf16>, vector<16x8xf32> -> vector<16x8xf32>
    %c3_102 = arith.constant 3 : index
    %c0_103 = arith.constant 0 : index
    %c0_104 = arith.constant 0 : index
    %157 = vector.load %arg4[%c3_102, %c0_103, %c0_104] : memref<4x1x8xf32, #tpu.memory_space<vmem>>, vector<1x1x8xf32>
    %158 = vector.shape_cast %157 : vector<1x1x8xf32> to vector<1x8xf32>
    %159 = vector.broadcast %158 : vector<1x8xf32> to vector<16x8xf32>
    %160 = arith.addf %156, %159 : vector<16x8xf32>
    %c3_105 = arith.constant 3 : index
    %c0_106 = arith.constant 0 : index
    %c0_107 = arith.constant 0 : index
    %161 = vector.load %arg2[%c3_105, %c0_106, %c0_107] : memref<4x32x8xbf16, #tpu.memory_space<vmem>>, vector<1x32x8xbf16>
    %162 = vector.shape_cast %161 : vector<1x32x8xbf16> to vector<32x8xbf16>
    %cst_108 = arith.constant dense<0.000000e+00> : vector<16x8xf32>
    %163 = tpu.matmul %19, %162, %cst_108 {dimension_numbers = #tpu.dot_dimension_numbers<[1], [0], [0], [1], [0, 0, 1, 1], [], []>} : vector<16x32xbf16>, vector<32x8xbf16>, vector<16x8xf32> -> vector<16x8xf32>
    %c3_109 = arith.constant 3 : index
    %c0_110 = arith.constant 0 : index
    %c0_111 = arith.constant 0 : index
    %164 = vector.load %arg5[%c3_109, %c0_110, %c0_111] : memref<4x1x8xf32, #tpu.memory_space<vmem>>, vector<1x1x8xf32>
    %165 = vector.shape_cast %164 : vector<1x1x8xf32> to vector<1x8xf32>
    %166 = vector.broadcast %165 : vector<1x8xf32> to vector<16x8xf32>
    %167 = arith.addf %163, %166 : vector<16x8xf32>
    %c3_112 = arith.constant 3 : index
    %c0_113 = arith.constant 0 : index
    %c0_114 = arith.constant 0 : index
    %168 = vector.load %arg3[%c3_112, %c0_113, %c0_114] : memref<4x32x8xbf16, #tpu.memory_space<vmem>>, vector<1x32x8xbf16>
    %169 = vector.shape_cast %168 : vector<1x32x8xbf16> to vector<32x8xbf16>
    %cst_115 = arith.constant dense<0.000000e+00> : vector<16x8xf32>
    %170 = tpu.matmul %19, %169, %cst_115 {dimension_numbers = #tpu.dot_dimension_numbers<[1], [0], [0], [1], [0, 0, 1, 1], [], []>} : vector<16x32xbf16>, vector<32x8xbf16>, vector<16x8xf32> -> vector<16x8xf32>
    %c3_116 = arith.constant 3 : index
    %c0_117 = arith.constant 0 : index
    %c0_118 = arith.constant 0 : index
    %171 = vector.load %arg6[%c3_116, %c0_117, %c0_118] : memref<4x1x8xf32, #tpu.memory_space<vmem>>, vector<1x1x8xf32>
    %172 = vector.shape_cast %171 : vector<1x1x8xf32> to vector<1x8xf32>
    %173 = vector.broadcast %172 : vector<1x8xf32> to vector<16x8xf32>
    %174 = arith.addf %170, %173 : vector<16x8xf32>
    %175 = arith.truncf %160 : vector<16x8xf32> to vector<16x8xbf16>
    %176 = arith.truncf %167 : vector<16x8xf32> to vector<16x8xbf16>
    %cst_119 = arith.constant dense<0.000000e+00> : vector<16x16xf32>
    %177 = tpu.matmul %175, %176, %cst_119 {dimension_numbers = #tpu.dot_dimension_numbers<[1], [1], [0], [0], [0, 0, 1, 0], [], []>} : vector<16x8xbf16>, vector<16x8xbf16>, vector<16x16xf32> -> vector<16x16xf32>
    %c3_120 = arith.constant 3 : index
    %c0_121 = arith.constant 0 : index
    %c0_122 = arith.constant 0 : index
    %178 = vector.load %arg13[%c3_120, %c0_121, %c0_122] : memref<4x16x16xf32, #tpu.memory_space<vmem>>, vector<1x16x16xf32>
    %179 = vector.shape_cast %178 : vector<1x16x16xf32> to vector<16x16xf32>
    %180 = arith.addf %177, %179 : vector<16x16xf32>
    %cst_123 = arith.constant dense<0xFF800000> : vector<16xf32>
    %181 = vector.multi_reduction <maximumf>, %180, %cst_123 [1] : vector<16x16xf32> to vector<16xf32>
    %182 = vector.shape_cast %181 : vector<16xf32> to vector<16x1xf32>
    %183 = vector.broadcast %182 : vector<16x1xf32> to vector<16x16xf32>
    %184 = arith.subf %180, %183 : vector<16x16xf32>
    %185 = math.exp %184 : vector<16x16xf32>
    %cst_124 = arith.constant dense<0.000000e+00> : vector<16xf32>
    %186 = vector.multi_reduction <add>, %185, %cst_124 [1] : vector<16x16xf32> to vector<16xf32>
    %187 = vector.shape_cast %186 : vector<16xf32> to vector<16x1xf32>
    %188 = tpu.reciprocal %187 {approx = true} : vector<16x1xf32> -> vector<16x1xf32>
    %189 = vector.broadcast %188 : vector<16x1xf32> to vector<16x16xf32>
    %190 = arith.mulf %185, %189 : vector<16x16xf32>
    %191 = arith.truncf %190 : vector<16x16xf32> to vector<16x16xbf16>
    %192 = arith.truncf %174 : vector<16x8xf32> to vector<16x8xbf16>
    %cst_125 = arith.constant dense<0.000000e+00> : vector<16x8xf32>
    %193 = tpu.matmul %191, %192, %cst_125 {dimension_numbers = #tpu.dot_dimension_numbers<[1], [0], [0], [1], [0, 0, 1, 1], [], []>} : vector<16x16xbf16>, vector<16x8xbf16>, vector<16x8xf32> -> vector<16x8xf32>
    %194 = arith.truncf %193 : vector<16x8xf32> to vector<16x8xbf16>
    %c3_126 = arith.constant 3 : index
    %c0_127 = arith.constant 0 : index
    %c0_128 = arith.constant 0 : index
    %195 = vector.load %arg7[%c3_126, %c0_127, %c0_128] : memref<4x8x32xbf16, #tpu.memory_space<vmem>>, vector<1x8x32xbf16>
    %196 = vector.shape_cast %195 : vector<1x8x32xbf16> to vector<8x32xbf16>
    %cst_129 = arith.constant dense<0.000000e+00> : vector<16x32xf32>
    %197 = tpu.matmul %194, %196, %cst_129 {dimension_numbers = #tpu.dot_dimension_numbers<[1], [0], [0], [1], [0, 0, 1, 1], [], []>} : vector<16x8xbf16>, vector<8x32xbf16>, vector<16x32xf32> -> vector<16x32xf32>
    %198 = arith.addf %153, %197 : vector<16x32xf32>
    %199 = arith.addf %0, %198 : vector<16x32xf32>
    %c0_130 = arith.constant 0 : index
    %c0_131 = arith.constant 0 : index
    %200 = vector.load %arg8[%c0_130, %c0_131] : memref<1x32xf32, #tpu.memory_space<vmem>>, vector<1x32xf32>
    %201 = vector.broadcast %200 : vector<1x32xf32> to vector<16x32xf32>
    %202 = arith.addf %199, %201 : vector<16x32xf32>
    %203 = arith.truncf %202 : vector<16x32xf32> to vector<16x32xbf16>
    %c0_132 = arith.constant 0 : index
    %c0_133 = arith.constant 0 : index
    %204 = vector.load %arg9[%c0_132, %c0_133] : memref<32x256xbf16, #tpu.memory_space<vmem>>, vector<32x256xbf16>
    %cst_134 = arith.constant dense<0.000000e+00> : vector<16x256xf32>
    %205 = tpu.matmul %203, %204, %cst_134 {dimension_numbers = #tpu.dot_dimension_numbers<[1], [0], [0], [1], [0, 0, 1, 1], [], []>} : vector<16x32xbf16>, vector<32x256xbf16>, vector<16x256xf32> -> vector<16x256xf32>
    %c0_135 = arith.constant 0 : index
    %c0_136 = arith.constant 0 : index
    %206 = vector.load %arg10[%c0_135, %c0_136] : memref<1x256xf32, #tpu.memory_space<vmem>>, vector<1x256xf32>
    %207 = vector.broadcast %206 : vector<1x256xf32> to vector<16x256xf32>
    %208 = arith.addf %205, %207 : vector<16x256xf32>
    %209 = vector.extract_strided_slice %208 {offsets = [0, 0], sizes = [16, 128], strides = [1, 1]} : vector<16x256xf32> to vector<16x128xf32>
    %210 = vector.extract_strided_slice %208 {offsets = [0, 128], sizes = [16, 128], strides = [1, 1]} : vector<16x256xf32> to vector<16x128xf32>
    %211 = arith.negf %209 : vector<16x128xf32>
    %212 = math.exp %211 : vector<16x128xf32>
    %cst_137 = arith.constant 1.000000e+00 : f32
    %213 = vector.broadcast %cst_137 : f32 to vector<16x128xf32>
    %214 = arith.addf %213, %212 : vector<16x128xf32>
    %215 = arith.divf %213, %214 : vector<16x128xf32>
    %216 = arith.mulf %209, %215 : vector<16x128xf32>
    %217 = arith.mulf %216, %210 : vector<16x128xf32>
    %218 = arith.truncf %217 : vector<16x128xf32> to vector<16x128xbf16>
    %c0_138 = arith.constant 0 : index
    %c0_139 = arith.constant 0 : index
    %219 = vector.load %arg11[%c0_138, %c0_139] : memref<128x32xbf16, #tpu.memory_space<vmem>>, vector<128x32xbf16>
    %cst_140 = arith.constant dense<0.000000e+00> : vector<16x32xf32>
    %220 = tpu.matmul %218, %219, %cst_140 {dimension_numbers = #tpu.dot_dimension_numbers<[1], [0], [0], [1], [0, 0, 1, 1], [], []>} : vector<16x128xbf16>, vector<128x32xbf16>, vector<16x32xf32> -> vector<16x32xf32>
    %c0_141 = arith.constant 0 : index
    %c0_142 = arith.constant 0 : index
    %221 = vector.load %arg12[%c0_141, %c0_142] : memref<1x32xf32, #tpu.memory_space<vmem>>, vector<1x32xf32>
    %222 = vector.broadcast %221 : vector<1x32xf32> to vector<16x32xf32>
    %223 = arith.addf %220, %222 : vector<16x32xf32>
    %224 = arith.addf %202, %223 : vector<16x32xf32>
    %c0_143 = arith.constant 0 : index
    %c0_144 = arith.constant 0 : index
    %225 = vector.load %arg14[%c0_143, %c0_144] : memref<16x32xf32, #tpu.memory_space<vmem>>, vector<16x32xf32>
    tpu.vector_store %arg14[%c0_143, %c0_144], %224 {strides = array<i32>} : memref<16x32xf32, #tpu.memory_space<vmem>>, vector<16x32xf32>,
    return
  }
}

</mosaic_0001>

<llo_original>
// kernel: alibi_confit_block.1
$region0: #{alibi_confit_block.1}
  #allocation0 [shape = 'u32[]', space=smem, size = 0x4, offset = 0x4, fixed_abs, tag = 'smem constant byte address 0x4 - core index']
  #allocation1 [shape = 'u32[144,128]{1,0:T(1,128)}', space=vmem, size = 0x12000, scoped, tag = 'internal scratch']
  %s0 = inlined_call_operand.vmem [shape: f32[16,32], index: 0, kind: input, shape index: {}]
  %s1 = inlined_call_operand.vmem [shape: bf16[4,32,8], index: 1, kind: input, shape index: {}]
  %s2 = inlined_call_operand.vmem [shape: bf16[4,32,8], index: 2, kind: input, shape index: {}]
  %s3 = inlined_call_operand.vmem [shape: bf16[4,32,8], index: 3, kind: input, shape index: {}]
  %s4 = inlined_call_operand.vmem [shape: f32[4,1,8], index: 4, kind: input, shape index: {}]
  %s5 = inlined_call_operand.vmem [shape: f32[4,1,8], index: 5, kind: input, shape index: {}]
  %s6 = inlined_call_operand.vmem [shape: f32[4,1,8], index: 6, kind: input, shape index: {}]
  %s7 = inlined_call_operand.vmem [shape: bf16[4,8,32], index: 7, kind: input, shape index: {}]
  %s8 = inlined_call_operand.vmem [shape: f32[1,32], index: 8, kind: input, shape index: {}]
  %s9 = inlined_call_operand.vmem [shape: bf16[32,256], index: 9, kind: input, shape index: {}]
  %s10 = inlined_call_operand.vmem [shape: f32[1,256], index: 10, kind: input, shape index: {}]
  %s11 = inlined_call_operand.vmem [shape: bf16[128,32], index: 11, kind: input, shape index: {}]
  %s12 = inlined_call_operand.vmem [shape: f32[1,32], index: 12, kind: input, shape index: {}]
  %s13 = inlined_call_operand.vmem [shape: f32[4,16,16], index: 13, kind: input, shape index: {}]
  %s14 = inlined_call_operand.hbm [shape: f32[16,32], index: 14, kind: output, shape index: {}]
  %s15 = sld [smem:[#allocation0]]
  $region66: #{alibi_confit_block.1} parent=0
    _
  %s17 = ssub.s32 1, %s15
  %s18 = scalar_select 0, %s17, %s15
  $region1: #{alibi_confit_block.1} parent=0
    #allocation2 [shape = 'u8[8192]{0}', space=vmem, size = 0x2000, scoped, tag = 'output window, operand 0, single buffered']
    #allocation3 [shape = 's32[1]{0}', space=sflag, size = 0x4, scoped, tag = 'scoped memory for alibi_confit_block.1']
    %19 = vsyncpa [#allocation3], 0
    // Predicated region
    $region2: #{alibi_confit_block.1} parent=1 // pred_check
      _
    $region3: #{alibi_confit_block.1} parent=1 // pred_check_branch
      %21 = sbr.rel (0) target = $region5
    $region4: #{alibi_confit_block.1} parent=1 // pred_region
      _
    $region5: #{alibi_confit_block.1} parent=1 // pred_fallthru
      _
    // Predicated region
    $region6: #{alibi_confit_block.1} parent=1 // pred_check
      _
    $region7: #{alibi_confit_block.1} parent=1 // pred_check_branch
      %23 = sbr.rel (0) target = $region9
    $region8: #{alibi_confit_block.1} parent=1 // pred_region
      _
    $region9: #{alibi_confit_block.1} parent=1 // pred_fallthru
      _
    // Predicated region
    $region10: #{alibi_confit_block.1} parent=1 // pred_check
      _
    $region11: #{alibi_confit_block.1} parent=1 // pred_check_branch
      %25 = sbr.rel (0) target = $region13
    $region12: #{alibi_confit_block.1} parent=1 // pred_region
      _
    $region13: #{alibi_confit_block.1} parent=1 // pred_fallthru
      _
    // Predicated region
    $region14: #{alibi_confit_block.1} parent=1 // pred_check
      _
    $region15: #{alibi_confit_block.1} parent=1 // pred_check_branch
      %27 = sbr.rel (0) target = $region17
    $region16: #{alibi_confit_block.1} parent=1 // pred_region
      _
    $region17: #{alibi_confit_block.1} parent=1 // pred_fallthru
      _
    // Predicated region
    $region18: #{alibi_confit_block.1} parent=1 // pred_check
      _
    $region19: #{alibi_confit_block.1} parent=1 // pred_check_branch
      %29 = sbr.rel (0) target = $region21
    $region20: #{alibi_confit_block.1} parent=1 // pred_region
      _
    $region21: #{alibi_confit_block.1} parent=1 // pred_fallthru
      _
    // Predicated region
    $region22: #{alibi_confit_block.1} parent=1 // pred_check
      _
    $region23: #{alibi_confit_block.1} parent=1 // pred_check_branch
      %31 = sbr.rel (0) target = $region25
    $region24: #{alibi_confit_block.1} parent=1 // pred_region
      _
    $region25: #{alibi_confit_block.1} parent=1 // pred_fallthru
      _
    // Predicated region
    $region26: #{alibi_confit_block.1} parent=1 // pred_check
      _
    $region27: #{alibi_confit_block.1} parent=1 // pred_check_branch
      %33 = sbr.rel (0) target = $region29
    $region28: #{alibi_confit_block.1} parent=1 // pred_region
      _
    $region29: #{alibi_confit_block.1} parent=1 // pred_fallthru
      _
    // Predicated region
    $region30: #{alibi_confit_block.1} parent=1 // pred_check
      _
    $region31: #{alibi_confit_block.1} parent=1 // pred_check_branch
      %35 = sbr.rel (0) target = $region33
    $region32: #{alibi_confit_block.1} parent=1 // pred_region
      _
    $region33: #{alibi_confit_block.1} parent=1 // pred_fallthru
      _
    // Predicated region
    $region34: #{alibi_confit_block.1} parent=1 // pred_check
      _
    $region35: #{alibi_confit_block.1} parent=1 // pred_check_branch
      %37 = sbr.rel (0) target = $region37
    $region36: #{alibi_confit_block.1} parent=1 // pred_region
      _
    $region37: #{alibi_confit_block.1} parent=1 // pred_fallthru
      _
    // Predicated region
    $region38: #{alibi_confit_block.1} parent=1 // pred_check
      _
    $region39: #{alibi_confit_block.1} parent=1 // pred_check_branch
      %39 = sbr.rel (0) target = $region41
    $region40: #{alibi_confit_block.1} parent=1 // pred_region
      _
    $region41: #{alibi_confit_block.1} parent=1 // pred_fallthru
      _
    // Predicated region
    $region42: #{alibi_confit_block.1} parent=1 // pred_check
      _
    $region43: #{alibi_confit_block.1} parent=1 // pred_check_branch
      %41 = sbr.rel (0) target = $region45
    $region44: #{alibi_confit_block.1} parent=1 // pred_region
      _
    $region45: #{alibi_confit_block.1} parent=1 // pred_fallthru
      _
    // Predicated region
    $region46: #{alibi_confit_block.1} parent=1 // pred_check
      _
    $region47: #{alibi_confit_block.1} parent=1 // pred_check_branch
      %43 = sbr.rel (0) target = $region49
    $region48: #{alibi_confit_block.1} parent=1 // pred_region
      _
    $region49: #{alibi_confit_block.1} parent=1 // pred_fallthru
      _
    // Predicated region
    $region50: #{alibi_confit_block.1} parent=1 // pred_check
      _
    $region51: #{alibi_confit_block.1} parent=1 // pred_check_branch
      %45 = sbr.rel (0) target = $region53
    $region52: #{alibi_confit_block.1} parent=1 // pred_region
      _
    $region53: #{alibi_confit_block.1} parent=1 // pred_fallthru
      _
    // Predicated region
    $region54: #{alibi_confit_block.1} parent=1 // pred_check
      _
    $region55: #{alibi_confit_block.1} parent=1 // pred_check_branch
      %47 = sbr.rel (0) target = $region57
    $region56: #{alibi_confit_block.1} parent=1 // pred_region
      _
    $region57: #{alibi_confit_block.1} parent=1 // pred_fallthru
      _
    %v49 = vld [vmem:[%s0] sm:$0xff]
    %v50 = vld [vmem:[%s0 + $0x8] sm:$0xff]
    %vm51 = vcmask 261120
    %v52 = vsel %vm51, %v49, 0.0
    %53 = vadd.xlane.f32.xlu0 %v52
    %v54 = vpop.xlane.xlu0 %53
    %v55 = vsel %vm51, %v50, 0.0
    %56 = vadd.xlane.f32.xlu0 %v55
    %v57 = vpop.xlane.xlu0 %56
    %v58 = vrcp.pop 32.0
    %v59 = vmul.f32 %v54, %v58
    %v60 = vmul.f32 %v57, %v58
    %v61 = vsub.f32 %v49, %v59
    %v62 = vsub.f32 %v50, %v60
    %v63 = vmul.f32 %v61, %v61
    %v64 = vmul.f32 %v62, %v62
    %v65 = vsel %vm51, %v63, 0.0
    %66 = vadd.xlane.f32.xlu0 %v65
    %v67 = vpop.xlane.xlu0 %66
    %v68 = vsel %vm51, %v64, 0.0
    %69 = vadd.xlane.f32.xlu0 %v68
    %v70 = vpop.xlane.xlu0 %69
    %v71 = vmul.f32 %v67, %v58
    %v72 = vmul.f32 %v70, %v58
    %v73 = vadd.f32 %v71, 1e-05
    %v74 = vadd.f32 %v72, 1e-05
    %v75 = vrsqrt.pop %v73
    %v76 = vrsqrt.pop %v74
    %v77 = vmul.f32 %v61, %v75
    %v78 = vmul.f32 %v62, %v76
    %v79 = vpack.c.bf16 %v78, %v77
    %v80 = vld [vmem:[%s1] sm:$0xf]
    %v81 = vld [vmem:[%s1 + $0x4] sm:$0xf]
    %v82 = vld [vmem:[%s1 + $0x8] sm:$0xf]
    %v83 = vld [vmem:[%s1 + $0xc] sm:$0xf]
    %v84 = vld [vmem:[%s4] sm:$0x1]
    %v86 = vlaneseq
    %v87 = vshrl.u32 %v86, 7
    %v88 = vsub.s32 0, %v87
    %v89 = vrot.slane %v84, %v88
    %v95 = vunpack.c.l.b16 %v80
    %v96 = vunpack.c.l.b16 %v81
    %v97 = vunpack.c.l.b16 %v82
    %v98 = vunpack.c.l.b16 %v83
    %v99 = vpack.c.b16 %v96, %v95
    %v100 = vpack.c.b16 %v98, %v97
    %v104 = vsel %vm51, %v79, 0
    %106 = vmatprep.subr.bf16.mxu0 0
    %107 = vmatpush1.bf16.msra.mxu0 %v99
    %108 = vmatprep.subr.bf16.mxu0 0
    %109 = vmatpush1.bf16.msra.mxu0 %v100
    %110 = vmatprep.subr.bf16.mxu0 0
    %111 = vmatpush1.bf16.msra.mxu0 0
    %112 = vmatprep.subr.bf16.mxu0 0
    %113 = vmatpush1.bf16.msra.mxu0 0
    %114 = vmatprep.subr.bf16.mxu0 0
    %115 = vmatpush1.bf16.msra.mxu0 0
    %116 = vmatprep.subr.bf16.mxu0 0
    %117 = vmatpush1.bf16.msra.mxu0 0
    %118 = vmatprep.subr.bf16.mxu0 0
    %119 = vmatpush1.bf16.msra.mxu0 0
    %120 = vmatprep.subr.bf16.mxu0 0
    %121 = vmatpush1.bf16.msra.mxu0 0
    %122 = vmatprep.subr.bf16.mxu0 0
    %123 = vmatpush1.bf16.msra.mxu0 0
    %124 = vmatprep.subr.bf16.mxu0 0
    %125 = vmatpush1.bf16.msra.mxu0 0
    %126 = vmatprep.subr.bf16.mxu0 0
    %127 = vmatpush1.bf16.msra.mxu0 0
    %128 = vmatprep.subr.bf16.mxu0 0
    %129 = vmatpush1.bf16.msra.mxu0 0
    %130 = vmatprep.subr.bf16.mxu0 0
    %131 = vmatpush1.bf16.msra.mxu0 0
    %132 = vmatprep.subr.bf16.mxu0 0
    %133 = vmatpush1.bf16.msra.mxu0 0
    %134 = vmatprep.subr.bf16.mxu0 0
    %135 = vmatpush1.bf16.msra.mxu0 0
    %136 = vmatprep.subr.bf16.mxu0 0
    %137 = vmatpush1.bf16.msra.mxu0 0
    %138 = vmatprep.mubr.bf16.mxu0 0
    %139 = vmatmul.mubr.bf16.gmra.mrb[0].mxu0 %v104
    %v140 = vpop.f32.mrb[0].mxu0
    %v141 = vadd.f32 %v89, %v140
    %v142 = vpop.f32.mrb[0].mxu0
    %v143 = vpop.f32.mrb[0].mxu0
    %v144 = vadd.f32 %v89, %v143
    %v145 = vpop.f32.mrb[0].mxu0
    %146 = vdwg.mxu0
    %v147 = vld [vmem:[%s2] sm:$0xf]
    %v148 = vld [vmem:[%s2 + $0x4] sm:$0xf]
    %v149 = vld [vmem:[%s2 + $0x8] sm:$0xf]
    %v150 = vld [vmem:[%s2 + $0xc] sm:$0xf]
    %v151 = vld [vmem:[%s5] sm:$0x1]
    %v153 = vlaneseq
    %v154 = vshrl.u32 %v153, 7
    %v155 = vsub.s32 0, %v154
    %v156 = vrot.slane %v151, %v155
    %v162 = vunpack.c.l.b16 %v147
    %v163 = vunpack.c.l.b16 %v148
    %v164 = vunpack.c.l.b16 %v149
    %v165 = vunpack.c.l.b16 %v150
    %v166 = vpack.c.b16 %v163, %v162
    %v167 = vpack.c.b16 %v165, %v164
    %170 = vmatprep.subr.bf16.mxu0 0
    %171 = vmatpush1.bf16.msra.mxu0 %v166
    %172 = vmatprep.subr.bf16.mxu0 0
    %173 = vmatpush1.bf16.msra.mxu0 %v167
    %174 = vmatprep.subr.bf16.mxu0 0
    %175 = vmatpush1.bf16.msra.mxu0 0
    %176 = vmatprep.subr.bf16.mxu0 0
    %177 = vmatpush1.bf16.msra.mxu0 0
    %178 = vmatprep.subr.bf16.mxu0 0
    %179 = vmatpush1.bf16.msra.mxu0 0
    %180 = vmatprep.subr.bf16.mxu0 0
    %181 = vmatpush1.bf16.msra.mxu0 0
    %182 = vmatprep.subr.bf16.mxu0 0
    %183 = vmatpush1.bf16.msra.mxu0 0
    %184 = vmatprep.subr.bf16.mxu0 0
    %185 = vmatpush1.bf16.msra.mxu0 0
    %186 = vmatprep.subr.bf16.mxu0 0
    %187 = vmatpush1.bf16.msra.mxu0 0
    %188 = vmatprep.subr.bf16.mxu0 0
    %189 = vmatpush1.bf16.msra.mxu0 0
    %190 = vmatprep.subr.bf16.mxu0 0
    %191 = vmatpush1.bf16.msra.mxu0 0
    %192 = vmatprep.subr.bf16.mxu0 0
    %193 = vmatpush1.bf16.msra.mxu0 0
    %194 = vmatprep.subr.bf16.mxu0 0
    %195 = vmatpush1.bf16.msra.mxu0 0
    %196 = vmatprep.subr.bf16.mxu0 0
    %197 = vmatpush1.bf16.msra.mxu0 0
    %198 = vmatprep.subr.bf16.mxu0 0
    %199 = vmatpush1.bf16.msra.mxu0 0
    %200 = vmatprep.subr.bf16.mxu0 0
    %201 = vmatpush1.bf16.msra.mxu0 0
    %202 = vmatprep.mubr.bf16.mxu0 0
    %203 = vmatmul.mubr.bf16.gmra.mrb[0].mxu0 %v104
    %v204 = vpop.f32.mrb[0].mxu0
    %v205 = vadd.f32 %v156, %v204
    %v206 = vpop.f32.mrb[0].mxu0
    %v207 = vpop.f32.mrb[0].mxu0
    %v208 = vadd.f32 %v156, %v207
    %v209 = vpop.f32.mrb[0].mxu0
    %210 = vdwg.mxu0
    %v211 = vld [vmem:[%s3] sm:$0xf]
    %v212 = vld [vmem:[%s3 + $0x4] sm:$0xf]
    %v213 = vld [vmem:[%s3 + $0x8] sm:$0xf]
    %v214 = vld [vmem:[%s3 + $0xc] sm:$0xf]
    %v215 = vld [vmem:[%s6] sm:$0x1]
    %v217 = vlaneseq
    %v218 = vshrl.u32 %v217, 7
    %v219 = vsub.s32 0, %v218
    %v220 = vrot.slane %v215, %v219
    %v226 = vunpack.c.l.b16 %v211
    %v227 = vunpack.c.l.b16 %v212
    %v228 = vunpack.c.l.b16 %v213
    %v229 = vunpack.c.l.b16 %v214
    %v230 = vpack.c.b16 %v227, %v226
    %v231 = vpack.c.b16 %v229, %v228
    %234 = vmatprep.subr.bf16.mxu0 0
    %235 = vmatpush1.bf16.msra.mxu0 %v230
    %236 = vmatprep.subr.bf16.mxu0 0
    %237 = vmatpush1.bf16.msra.mxu0 %v231
    %238 = vmatprep.subr.bf16.mxu0 0
    %239 = vmatpush1.bf16.msra.mxu0 0
    %240 = vmatprep.subr.bf16.mxu0 0
    %241 = vmatpush1.bf16.msra.mxu0 0
    %242 = vmatprep.subr.bf16.mxu0 0
    %243 = vmatpush1.bf16.msra.mxu0 0
    %244 = vmatprep.subr.bf16.mxu0 0
    %245 = vmatpush1.bf16.msra.mxu0 0
    %246 = vmatprep.subr.bf16.mxu0 0
    %247 = vmatpush1.bf16.msra.mxu0 0
    %248 = vmatprep.subr.bf16.mxu0 0
    %249 = vmatpush1.bf16.msra.mxu0 0
    %250 = vmatprep.subr.bf16.mxu0 0
    %251 = vmatpush1.bf16.msra.mxu0 0
    %252 = vmatprep.subr.bf16.mxu0 0
    %253 = vmatpush1.bf16.msra.mxu0 0
    %254 = vmatprep.subr.bf16.mxu0 0
    %255 = vmatpush1.bf16.msra.mxu0 0
    %256 = vmatprep.subr.bf16.mxu0 0
    %257 = vmatpush1.bf16.msra.mxu0 0
    %258 = vmatprep.subr.bf16.mxu0 0
    %259 = vmatpush1.bf16.msra.mxu0 0
    %260 = vmatprep.subr.bf16.mxu0 0
    %261 = vmatpush1.bf16.msra.mxu0 0
    %262 = vmatprep.subr.bf16.mxu0 0
    %263 = vmatpush1.bf16.msra.mxu0 0
    %264 = vmatprep.subr.bf16.mxu0 0
    %265 = vmatpush1.bf16.msra.mxu0 0
    %266 = vmatprep.mubr.bf16.mxu0 0
    %267 = vmatmul.mubr.bf16.gmra.mrb[0].mxu0 %v104
    %v268 = vpop.f32.mrb[0].mxu0
    %v269 = vadd.f32 %v220, %v268
    %v270 = vpop.f32.mrb[0].mxu0
    %v271 = vpop.f32.mrb[0].mxu0
    %v272 = vadd.f32 %v220, %v271
    %v273 = vpop.f32.mrb[0].mxu0
    %274 = vdwg.mxu0
    %v275 = vpack.c.bf16 %v144, %v141
    %v276 = vpack.c.bf16 %v208, %v205
    %v277 = vld [vmem:[%s13] sm:$0xff]
    %v278 = vld [vmem:[%s13 + $0x8] sm:$0xff]
    %vm279 = vcmask 64512
    %v281 = vsel %vm279, %v275, 0
    %v284 = vsel %vm279, %v276, 0
    %286 = vmatprep.subr.bf16.mxu0 0
    %287 = vmatpush1.bf16.xpose.msra.mxu0 %v284
    %288 = vmatprep.subr.bf16.mxu0 0
    %289 = vmatpush1.bf16.xpose.msra.mxu0 0
    %290 = vmatprep.subr.bf16.mxu0 0
    %291 = vmatpush1.bf16.xpose.msra.mxu0 0
    %292 = vmatprep.subr.bf16.mxu0 0
    %293 = vmatpush1.bf16.xpose.msra.mxu0 0
    %294 = vmatprep.subr.bf16.mxu0 0
    %295 = vmatpush1.bf16.xpose.msra.mxu0 0
    %296 = vmatprep.subr.bf16.mxu0 0
    %297 = vmatpush1.bf16.xpose.msra.mxu0 0
    %298 = vmatprep.subr.bf16.mxu0 0
    %299 = vmatpush1.bf16.xpose.msra.mxu0 0
    %300 = vmatprep.subr.bf16.mxu0 0
    %301 = vmatpush1.bf16.xpose.msra.mxu0 0
    %302 = vmatprep.subr.bf16.mxu0 0
    %303 = vmatpush1.bf16.xpose.msra.mxu0 0
    %304 = vmatprep.subr.bf16.mxu0 0
    %305 = vmatpush1.bf16.xpose.msra.mxu0 0
    %306 = vmatprep.subr.bf16.mxu0 0
    %307 = vmatpush1.bf16.xpose.msra.mxu0 0
    %308 = vmatprep.subr.bf16.mxu0 0
    %309 = vmatpush1.bf16.xpose.msra.mxu0 0
    %310 = vmatprep.subr.bf16.mxu0 0
    %311 = vmatpush1.bf16.xpose.msra.mxu0 0
    %312 = vmatprep.subr.bf16.mxu0 0
    %313 = vmatpush1.bf16.xpose.msra.mxu0 0
    %314 = vmatprep.subr.bf16.mxu0 0
    %315 = vmatpush1.bf16.xpose.msra.mxu0 0
    %316 = vmatprep.subr.bf16.mxu0 0
    %317 = vmatpush1.bf16.xpose.msra.mxu0 0
    %318 = vmatprep.mubr.bf16.mxu0 0
    %319 = vmatmul.mubr.bf16.gmra.mrb[0].mxu0 %v281
    %v320 = vpop.f32.mrb[0].mxu0
    %v321 = vadd.f32 %v277, %v320
    %v322 = vpop.f32.mrb[0].mxu0
    %v323 = vpop.f32.mrb[0].mxu0
    %v324 = vadd.f32 %v278, %v323
    %v325 = vpop.f32.mrb[0].mxu0
    %326 = vdwg.mxu0
    %vm327 = vcmask 130048
    %v328 = vsel %vm327, %v321, -inf
    %329 = vmax.xlane.f32.xlu0 %v328
    %v330 = vpop.xlane.xlu0 %329
    %v331 = vsel %vm327, %v324, -inf
    %332 = vmax.xlane.f32.xlu0 %v331
    %v333 = vpop.xlane.xlu0 %332
    %v334 = vsub.f32 %v321, %v330
    %v335 = vsub.f32 %v324, %v333
    %v336 = vmul.f32 %v334, 1.442695
    %v337 = vpow.pop %v336
    %v338 = vmul.f32 %v335, 1.442695
    %v339 = vpow.pop %v338
    %v340 = vsel %vm327, %v337, 0.0
    %341 = vadd.xlane.f32.xlu0 %v340
    %v342 = vpop.xlane.xlu0 %341
    %v343 = vsel %vm327, %v339, 0.0
    %344 = vadd.xlane.f32.xlu0 %v343
    %v345 = vpop.xlane.xlu0 %344
    %v346 = vrcp.pop %v342
    %v347 = vrcp.pop %v345
    %v348 = vmul.f32 %v337, %v346
    %v349 = vmul.f32 %v339, %v347
    %v350 = vpack.c.bf16 %v349, %v348
    %v351 = vpack.c.bf16 %v272, %v269
    %v353 = vsel %vm327, %v350, 0
    %355 = vmatprep.subr.bf16.mxu0 0
    %356 = vmatpush1.bf16.msra.mxu0 %v351
    %357 = vmatprep.subr.bf16.mxu0 0
    %358 = vmatpush1.bf16.msra.mxu0 0
    %359 = vmatprep.subr.bf16.mxu0 0
    %360 = vmatpush1.bf16.msra.mxu0 0
    %361 = vmatprep.subr.bf16.mxu0 0
    %362 = vmatpush1.bf16.msra.mxu0 0
    %363 = vmatprep.subr.bf16.mxu0 0
    %364 = vmatpush1.bf16.msra.mxu0 0
    %365 = vmatprep.subr.bf16.mxu0 0
    %366 = vmatpush1.bf16.msra.mxu0 0
    %367 = vmatprep.subr.bf16.mxu0 0
    %368 = vmatpush1.bf16.msra.mxu0 0
    %369 = vmatprep.subr.bf16.mxu0 0
    %370 = vmatpush1.bf16.msra.mxu0 0
    %371 = vmatprep.subr.bf16.mxu0 0
    %372 = vmatpush1.bf16.msra.mxu0 0
    %373 = vmatprep.subr.bf16.mxu0 0
    %374 = vmatpush1.bf16.msra.mxu0 0
    %375 = vmatprep.subr.bf16.mxu0 0
    %376 = vmatpush1.bf16.msra.mxu0 0
    %377 = vmatprep.subr.bf16.mxu0 0
    %378 = vmatpush1.bf16.msra.mxu0 0
    %379 = vmatprep.subr.bf16.mxu0 0
    %380 = vmatpush1.bf16.msra.mxu0 0
    %381 = vmatprep.subr.bf16.mxu0 0
    %382 = vmatpush1.bf16.msra.mxu0 0
    %383 = vmatprep.subr.bf16.mxu0 0
    %384 = vmatpush1.bf16.msra.mxu0 0
    %385 = vmatprep.subr.bf16.mxu0 0
    %386 = vmatpush1.bf16.msra.mxu0 0
    %387 = vmatprep.mubr.bf16.mxu0 0
    %388 = vmatmul.mubr.bf16.gmra.mrb[0].mxu0 %v353
    %v389 = vpop.f32.mrb[0].mxu0
    %v390 = vadd.f32 0.0, %v389
    %v391 = vpop.f32.mrb[0].mxu0
    %v392 = vpop.f32.mrb[0].mxu0
    %v393 = vadd.f32 0.0, %v392
    %v394 = vpop.f32.mrb[0].mxu0
    %395 = vdwg.mxu0
    %v396 = vpack.c.bf16 %v393, %v390
    %v397 = vld [vmem:[%s7] sm:$0xf]
    %s398 = scalar_lea.vmem %s1, 16
    %v399 = vld [vmem:[%s398] sm:$0xf]
    %v400 = vld [vmem:[%s398 + $0x4] sm:$0xf]
    %v401 = vld [vmem:[%s398 + $0x8] sm:$0xf]
    %v402 = vld [vmem:[%s398 + $0xc] sm:$0xf]
    %s403 = scalar_lea.vmem %s4, 1
    %v404 = vld [vmem:[%s403] sm:$0x1]
    %v406 = vlaneseq
    %v407 = vshrl.u32 %v406, 7
    %v408 = vsub.s32 0, %v407
    %v409 = vrot.slane %v404, %v408
    %v415 = vunpack.c.l.b16 %v399
    %v416 = vunpack.c.l.b16 %v400
    %v417 = vunpack.c.l.b16 %v401
    %v418 = vunpack.c.l.b16 %v402
    %v419 = vpack.c.b16 %v416, %v415
    %v420 = vpack.c.b16 %v418, %v417
    %423 = vmatprep.subr.bf16.mxu0 0
    %424 = vmatpush1.bf16.msra.mxu0 %v419
    %425 = vmatprep.subr.bf16.mxu0 0
    %426 = vmatpush1.bf16.msra.mxu0 %v420
    %427 = vmatprep.subr.bf16.mxu0 0
    %428 = vmatpush1.bf16.msra.mxu0 0
    %429 = vmatprep.subr.bf16.mxu0 0
    %430 = vmatpush1.bf16.msra.mxu0 0
    %431 = vmatprep.subr.bf16.mxu0 0
    %432 = vmatpush1.bf16.msra.mxu0 0
    %433 = vmatprep.subr.bf16.mxu0 0
    %434 = vmatpush1.bf16.msra.mxu0 0
    %435 = vmatprep.subr.bf16.mxu0 0
    %436 = vmatpush1.bf16.msra.mxu0 0
    %437 = vmatprep.subr.bf16.mxu0 0
    %438 = vmatpush1.bf16.msra.mxu0 0
    %439 = vmatprep.subr.bf16.mxu0 0
    %440 = vmatpush1.bf16.msra.mxu0 0
    %441 = vmatprep.subr.bf16.mxu0 0
    %442 = vmatpush1.bf16.msra.mxu0 0
    %443 = vmatprep.subr.bf16.mxu0 0
    %444 = vmatpush1.bf16.msra.mxu0 0
    %445 = vmatprep.subr.bf16.mxu0 0
    %446 = vmatpush1.bf16.msra.mxu0 0
    %447 = vmatprep.subr.bf16.mxu0 0
    %448 = vmatpush1.bf16.msra.mxu0 0
    %449 = vmatprep.subr.bf16.mxu0 0
    %450 = vmatpush1.bf16.msra.mxu0 0
    %451 = vmatprep.subr.bf16.mxu0 0
    %452 = vmatpush1.bf16.msra.mxu0 0
    %453 = vmatprep.subr.bf16.mxu0 0
    %454 = vmatpush1.bf16.msra.mxu0 0
    %455 = vmatprep.mubr.bf16.mxu0 0
    %456 = vmatmul.mubr.bf16.gmra.mrb[0].mxu0 %v104
    %v457 = vpop.f32.mrb[0].mxu0
    %v458 = vadd.f32 %v409, %v457
    %v459 = vpop.f32.mrb[0].mxu0
    %v460 = vpop.f32.mrb[0].mxu0
    %v461 = vadd.f32 %v409, %v460
    %v462 = vpop.f32.mrb[0].mxu0
    %463 = vdwg.mxu0
    %s464 = scalar_lea.vmem %s2, 16
    %v465 = vld [vmem:[%s464] sm:$0xf]
    %v466 = vld [vmem:[%s464 + $0x4] sm:$0xf]
    %v467 = vld [vmem:[%s464 + $0x8] sm:$0xf]
    %v468 = vld [vmem:[%s464 + $0xc] sm:$0xf]
    %s469 = scalar_lea.vmem %s5, 1
    %v470 = vld [vmem:[%s469] sm:$0x1]
    %v472 = vlaneseq
    %v473 = vshrl.u32 %v472, 7
    %v474 = vsub.s32 0, %v473
    %v475 = vrot.slane %v470, %v474
    %v481 = vunpack.c.l.b16 %v465
    %v482 = vunpack.c.l.b16 %v466
    %v483 = vunpack.c.l.b16 %v467
    %v484 = vunpack.c.l.b16 %v468
    %v485 = vpack.c.b16 %v482, %v481
    %v486 = vpack.c.b16 %v484, %v483
    %489 = vmatprep.subr.bf16.mxu0 0
    %490 = vmatpush1.bf16.msra.mxu0 %v485
    %491 = vmatprep.subr.bf16.mxu0 0
    %492 = vmatpush1.bf16.msra.mxu0 %v486
    %493 = vmatprep.subr.bf16.mxu0 0
    %494 = vmatpush1.bf16.msra.mxu0 0
    %495 = vmatprep.subr.bf16.mxu0 0
    %496 = vmatpush1.bf16.msra.mxu0 0
    %497 = vmatprep.subr.bf16.mxu0 0
    %498 = vmatpush1.bf16.msra.mxu0 0
    %499 = vmatprep.subr.bf16.mxu0 0
    %500 = vmatpush1.bf16.msra.mxu0 0
    %501 = vmatprep.subr.bf16.mxu0 0
    %502 = vmatpush1.bf16.msra.mxu0 0
    %503 = vmatprep.subr.bf16.mxu0 0
    %504 = vmatpush1.bf16.msra.mxu0 0
    %505 = vmatprep.subr.bf16.mxu0 0
    %506 = vmatpush1.bf16.msra.mxu0 0
    %507 = vmatprep.subr.bf16.mxu0 0
    %508 = vmatpush1.bf16.msra.mxu0 0
    %509 = vmatprep.subr.bf16.mxu0 0
    %510 = vmatpush1.bf16.msra.mxu0 0
    %511 = vmatprep.subr.bf16.mxu0 0
    %512 = vmatpush1.bf16.msra.mxu0 0
    %513 = vmatprep.subr.bf16.mxu0 0
    %514 = vmatpush1.bf16.msra.mxu0 0
    %515 = vmatprep.subr.bf16.mxu0 0
    %516 = vmatpush1.bf16.msra.mxu0 0
    %517 = vmatprep.subr.bf16.mxu0 0
    %518 = vmatpush1.bf16.msra.mxu0 0
    %519 = vmatprep.subr.bf16.mxu0 0
    %520 = vmatpush1.bf16.msra.mxu0 0
    %521 = vmatprep.mubr.bf16.mxu0 0
    %522 = vmatmul.mubr.bf16.gmra.mrb[0].mxu0 %v104
    %v523 = vpop.f32.mrb[0].mxu0
    %v524 = vadd.f32 %v475, %v523
    %v525 = vpop.f32.mrb[0].mxu0
    %v526 = vpop.f32.mrb[0].mxu0
    %v527 = vadd.f32 %v475, %v526
    %v528 = vpop.f32.mrb[0].mxu0
    %529 = vdwg.mxu0
    %s530 = scalar_lea.vmem %s3, 16
    %v531 = vld [vmem:[%s530] sm:$0xf]
    %v532 = vld [vmem:[%s530 + $0x4] sm:$0xf]
    %v533 = vld [vmem:[%s530 + $0x8] sm:$0xf]
    %v534 = vld [vmem:[%s530 + $0xc] sm:$0xf]
    %s535 = scalar_lea.vmem %s6, 1
    %v536 = vld [vmem:[%s535] sm:$0x1]
    %v538 = vlaneseq
    %v539 = vshrl.u32 %v538, 7
    %v540 = vsub.s32 0, %v539
    %v541 = vrot.slane %v536, %v540
    %v547 = vunpack.c.l.b16 %v531
    %v548 = vunpack.c.l.b16 %v532
    %v549 = vunpack.c.l.b16 %v533
    %v550 = vunpack.c.l.b16 %v534
    %v551 = vpack.c.b16 %v548, %v547
    %v552 = vpack.c.b16 %v550, %v549
    %555 = vmatprep.subr.bf16.mxu0 0
    %556 = vmatpush1.bf16.msra.mxu0 %v551
    %557 = vmatprep.subr.bf16.mxu0 0
    %558 = vmatpush1.bf16.msra.mxu0 %v552
    %559 = vmatprep.subr.bf16.mxu0 0
    %560 = vmatpush1.bf16.msra.mxu0 0
    %561 = vmatprep.subr.bf16.mxu0 0
    %562 = vmatpush1.bf16.msra.mxu0 0
    %563 = vmatprep.subr.bf16.mxu0 0
    %564 = vmatpush1.bf16.msra.mxu0 0
    %565 = vmatprep.subr.bf16.mxu0 0
    %566 = vmatpush1.bf16.msra.mxu0 0
    %567 = vmatprep.subr.bf16.mxu0 0
    %568 = vmatpush1.bf16.msra.mxu0 0
    %569 = vmatprep.subr.bf16.mxu0 0
    %570 = vmatpush1.bf16.msra.mxu0 0
    %571 = vmatprep.subr.bf16.mxu0 0
    %572 = vmatpush1.bf16.msra.mxu0 0
    %573 = vmatprep.subr.bf16.mxu0 0
    %574 = vmatpush1.bf16.msra.mxu0 0
    %575 = vmatprep.subr.bf16.mxu0 0
    %576 = vmatpush1.bf16.msra.mxu0 0
    %577 = vmatprep.subr.bf16.mxu0 0
    %578 = vmatpush1.bf16.msra.mxu0 0
    %579 = vmatprep.subr.bf16.mxu0 0
    %580 = vmatpush1.bf16.msra.mxu0 0
    %581 = vmatprep.subr.bf16.mxu0 0
    %582 = vmatpush1.bf16.msra.mxu0 0
    %583 = vmatprep.subr.bf16.mxu0 0
    %584 = vmatpush1.bf16.msra.mxu0 0
    %585 = vmatprep.subr.bf16.mxu0 0
    %586 = vmatpush1.bf16.msra.mxu0 0
    %587 = vmatprep.mubr.bf16.mxu0 0
    %588 = vmatmul.mubr.bf16.gmra.mrb[0].mxu0 %v104
    %v589 = vpop.f32.mrb[0].mxu0
    %v590 = vadd.f32 %v541, %v589
    %v591 = vpop.f32.mrb[0].mxu0
    %v592 = vpop.f32.mrb[0].mxu0
    %v593 = vadd.f32 %v541, %v592
    %v594 = vpop.f32.mrb[0].mxu0
    %595 = vdwg.mxu0
    %v596 = vpack.c.bf16 %v461, %v458
    %v597 = vpack.c.bf16 %v527, %v524
    %s598 = scalar_lea.vmem %s13, 16
    %v599 = vld [vmem:[%s598] sm:$0xff]
    %v600 = vld [vmem:[%s598 + $0x8] sm:$0xff]
    %v602 = vsel %vm279, %v596, 0
    %v605 = vsel %vm279, %v597, 0
    %607 = vmatprep.subr.bf16.mxu0 0
    %608 = vmatpush1.bf16.xpose.msra.mxu0 %v605
    %609 = vmatprep.subr.bf16.mxu0 0
    %610 = vmatpush1.bf16.xpose.msra.mxu0 0
    %611 = vmatprep.subr.bf16.mxu0 0
    %612 = vmatpush1.bf16.xpose.msra.mxu0 0
    %613 = vmatprep.subr.bf16.mxu0 0
    %614 = vmatpush1.bf16.xpose.msra.mxu0 0
    %615 = vmatprep.subr.bf16.mxu0 0
    %616 = vmatpush1.bf16.xpose.msra.mxu0 0
    %617 = vmatprep.subr.bf16.mxu0 0
    %618 = vmatpush1.bf16.xpose.msra.mxu0 0
    %619 = vmatprep.subr.bf16.mxu0 0
    %620 = vmatpush1.bf16.xpose.msra.mxu0 0
    %621 = vmatprep.subr.bf16.mxu0 0
    %622 = vmatpush1.bf16.xpose.msra.mxu0 0
    %623 = vmatprep.subr.bf16.mxu0 0
    %624 = vmatpush1.bf16.xpose.msra.mxu0 0
    %625 = vmatprep.subr.bf16.mxu0 0
    %626 = vmatpush1.bf16.xpose.msra.mxu0 0
    %627 = vmatprep.subr.bf16.mxu0 0
    %628 = vmatpush1.bf16.xpose.msra.mxu0 0
    %629 = vmatprep.subr.bf16.mxu0 0
    %630 = vmatpush1.bf16.xpose.msra.mxu0 0
    %631 = vmatprep.subr.bf16.mxu0 0
    %632 = vmatpush1.bf16.xpose.msra.mxu0 0
    %633 = vmatprep.subr.bf16.mxu0 0
    %634 = vmatpush1.bf16.xpose.msra.mxu0 0
    %635 = vmatprep.subr.bf16.mxu0 0
    %636 = vmatpush1.bf16.xpose.msra.mxu0 0
    %637 = vmatprep.subr.bf16.mxu0 0
    %638 = vmatpush1.bf16.xpose.msra.mxu0 0
    %639 = vmatprep.mubr.bf16.mxu0 0
    %640 = vmatmul.mubr.bf16.gmra.mrb[0].mxu0 %v602
    %v641 = vpop.f32.mrb[0].mxu0
    %v642 = vadd.f32 %v599, %v641
    %v643 = vpop.f32.mrb[0].mxu0
    %v644 = vpop.f32.mrb[0].mxu0
    %v645 = vadd.f32 %v600, %v644
    %v646 = vpop.f32.mrb[0].mxu0
    %647 = vdwg.mxu0
    %v648 = vsel %vm327, %v642, -inf
    %649 = vmax.xlane.f32.xlu0 %v648
    %v650 = vpop.xlane.xlu0 %649
    %v651 = vsel %vm327, %v645, -inf
    %652 = vmax.xlane.f32.xlu0 %v651
    %v653 = vpop.xlane.xlu0 %652
    %v654 = vsub.f32 %v642, %v650
    %v655 = vsub.f32 %v645, %v653
    %v656 = vmul.f32 %v654, 1.442695
    %v657 = vpow.pop %v656
    %v658 = vmul.f32 %v655, 1.442695
    %v659 = vpow.pop %v658
    %v660 = vsel %vm327, %v657, 0.0
    %661 = vadd.xlane.f32.xlu0 %v660
    %v662 = vpop.xlane.xlu0 %661
    %v663 = vsel %vm327, %v659, 0.0
    %664 = vadd.xlane.f32.xlu0 %v663
    %v665 = vpop.xlane.xlu0 %664
    %v666 = vrcp.pop %v662
    %v667 = vrcp.pop %v665
    %v668 = vmul.f32 %v657, %v666
    %v669 = vmul.f32 %v659, %v667
    %v670 = vpack.c.bf16 %v669, %v668
    %v671 = vpack.c.bf16 %v593, %v590
    %v673 = vsel %vm327, %v670, 0
    %675 = vmatprep.subr.bf16.mxu0 0
    %676 = vmatpush1.bf16.msra.mxu0 %v671
    %677 = vmatprep.subr.bf16.mxu0 0
    %678 = vmatpush1.bf16.msra.mxu0 0
    %679 = vmatprep.subr.bf16.mxu0 0
    %680 = vmatpush1.bf16.msra.mxu0 0
    %681 = vmatprep.subr.bf16.mxu0 0
    %682 = vmatpush1.bf16.msra.mxu0 0
    %683 = vmatprep.subr.bf16.mxu0 0
    %684 = vmatpush1.bf16.msra.mxu0 0
    %685 = vmatprep.subr.bf16.mxu0 0
    %686 = vmatpush1.bf16.msra.mxu0 0
    %687 = vmatprep.subr.bf16.mxu0 0
    %688 = vmatpush1.bf16.msra.mxu0 0
    %689 = vmatprep.subr.bf16.mxu0 0
    %690 = vmatpush1.bf16.msra.mxu0 0
    %691 = vmatprep.subr.bf16.mxu0 0
    %692 = vmatpush1.bf16.msra.mxu0 0
    %693 = vmatprep.subr.bf16.mxu0 0
    %694 = vmatpush1.bf16.msra.mxu0 0
    %695 = vmatprep.subr.bf16.mxu0 0
    %696 = vmatpush1.bf16.msra.mxu0 0
    %697 = vmatprep.subr.bf16.mxu0 0
    %698 = vmatpush1.bf16.msra.mxu0 0
    %699 = vmatprep.subr.bf16.mxu0 0
    %700 = vmatpush1.bf16.msra.mxu0 0
    %701 = vmatprep.subr.bf16.mxu0 0
    %702 = vmatpush1.bf16.msra.mxu0 0
    %703 = vmatprep.subr.bf16.mxu0 0
    %704 = vmatpush1.bf16.msra.mxu0 0
    %705 = vmatprep.subr.bf16.mxu0 0
    %706 = vmatpush1.bf16.msra.mxu0 0
    %707 = vmatprep.mubr.bf16.mxu0 0
    %708 = vmatmul.mubr.bf16.gmra.mrb[0].mxu0 %v673
    %v709 = vpop.f32.mrb[0].mxu0
    %v710 = vadd.f32 0.0, %v709
    %v711 = vpop.f32.mrb[0].mxu0
    %v712 = vpop.f32.mrb[0].mxu0
    %v713 = vadd.f32 0.0, %v712
    %v714 = vpop.f32.mrb[0].mxu0
    %715 = vdwg.mxu0
    %v716 = vpack.c.bf16 %v713, %v710
    %s717 = scalar_lea.vmem %s7, 4
    %v718 = vld [vmem:[%s717] sm:$0xf]
    %v720 = vsel %vm279, %v716, 0
    %vm722 = vcmask 1043456
    %v724 = vsel %vm722, %v718, 0
    %726 = vmatprep.subr.bf16.mxu0 0
    %727 = vmatpush1.bf16.msra.mxu0 %v724
    %728 = vmatprep.subr.bf16.mxu0 0
    %729 = vmatpush1.bf16.msra.mxu0 0
    %730 = vmatprep.subr.bf16.mxu0 0
    %731 = vmatpush1.bf16.msra.mxu0 0
    %732 = vmatprep.subr.bf16.mxu0 0
    %733 = vmatpush1.bf16.msra.mxu0 0
    %734 = vmatprep.subr.bf16.mxu0 0
    %735 = vmatpush1.bf16.msra.mxu0 0
    %736 = vmatprep.subr.bf16.mxu0 0
    %737 = vmatpush1.bf16.msra.mxu0 0
    %738 = vmatprep.subr.bf16.mxu0 0
    %739 = vmatpush1.bf16.msra.mxu0 0
    %740 = vmatprep.subr.bf16.mxu0 0
    %741 = vmatpush1.bf16.msra.mxu0 0
    %742 = vmatprep.subr.bf16.mxu0 0
    %743 = vmatpush1.bf16.msra.mxu0 0
    %744 = vmatprep.subr.bf16.mxu0 0
    %745 = vmatpush1.bf16.msra.mxu0 0
    %746 = vmatprep.subr.bf16.mxu0 0
    %747 = vmatpush1.bf16.msra.mxu0 0
    %748 = vmatprep.subr.bf16.mxu0 0
    %749 = vmatpush1.bf16.msra.mxu0 0
    %750 = vmatprep.subr.bf16.mxu0 0
    %751 = vmatpush1.bf16.msra.mxu0 0
    %752 = vmatprep.subr.bf16.mxu0 0
    %753 = vmatpush1.bf16.msra.mxu0 0
    %754 = vmatprep.subr.bf16.mxu0 0
    %755 = vmatpush1.bf16.msra.mxu0 0
    %756 = vmatprep.subr.bf16.mxu0 0
    %757 = vmatpush1.bf16.msra.mxu0 0
    %758 = vmatprep.mubr.bf16.mxu0 0
    %759 = vmatmul.mubr.bf16.gmra.mrb[0].mxu0 %v720
    %v760 = vpop.f32.mrb[0].mxu0
    %v761 = vadd.f32 0.0, %v760
    %v762 = vpop.f32.mrb[0].mxu0
    %v763 = vpop.f32.mrb[0].mxu0
    %v764 = vadd.f32 0.0, %v763
    %v765 = vpop.f32.mrb[0].mxu0
    %766 = vdwg.mxu0
    %v768 = vsel %vm279, %v396, 0
    %v771 = vsel %vm722, %v397, 0
    %773 = vmatprep.subr.bf16.mxu0 0
    %774 = vmatpush1.bf16.msra.mxu0 %v771
    %775 = vmatprep.subr.bf16.mxu0 0
    %776 = vmatpush1.bf16.msra.mxu0 0
    %777 = vmatprep.subr.bf16.mxu0 0
    %778 = vmatpush1.bf16.msra.mxu0 0
    %779 = vmatprep.subr.bf16.mxu0 0
    %780 = vmatpush1.bf16.msra.mxu0 0
    %781 = vmatprep.subr.bf16.mxu0 0
    %782 = vmatpush1.bf16.msra.mxu0 0
    %783 = vmatprep.subr.bf16.mxu0 0
    %784 = vmatpush1.bf16.msra.mxu0 0
    %785 = vmatprep.subr.bf16.mxu0 0
    %786 = vmatpush1.bf16.msra.mxu0 0
    %787 = vmatprep.subr.bf16.mxu0 0
    %788 = vmatpush1.bf16.msra.mxu0 0
    %789 = vmatprep.subr.bf16.mxu0 0
    %790 = vmatpush1.bf16.msra.mxu0 0
    %791 = vmatprep.subr.bf16.mxu0 0
    %792 = vmatpush1.bf16.msra.mxu0 0
    %793 = vmatprep.subr.bf16.mxu0 0
    %794 = vmatpush1.bf16.msra.mxu0 0
    %795 = vmatprep.subr.bf16.mxu0 0
    %796 = vmatpush1.bf16.msra.mxu0 0
    %797 = vmatprep.subr.bf16.mxu0 0
    %798 = vmatpush1.bf16.msra.mxu0 0
    %799 = vmatprep.subr.bf16.mxu0 0
    %800 = vmatpush1.bf16.msra.mxu0 0
    %801 = vmatprep.subr.bf16.mxu0 0
    %802 = vmatpush1.bf16.msra.mxu0 0
    %803 = vmatprep.subr.bf16.mxu0 0
    %804 = vmatpush1.bf16.msra.mxu0 0
    %805 = vmatprep.mubr.bf16.mxu0 0
    %806 = vmatmul.mubr.bf16.gmra.mrb[0].mxu0 %v768
    %v807 = vpop.f32.mrb[0].mxu0
    %v808 = vadd.f32 %v761, %v807
    %v809 = vpop.f32.mrb[0].mxu0
    %v810 = vpop.f32.mrb[0].mxu0
    %v811 = vadd.f32 %v764, %v810
    %v812 = vpop.f32.mrb[0].mxu0
    %813 = vdwg.mxu0
    %s814 = scalar_lea.vmem %s1, 32
    %v815 = vld [vmem:[%s814] sm:$0xf]
    %v816 = vld [vmem:[%s814 + $0x4] sm:$0xf]
    %v817 = vld [vmem:[%s814 + $0x8] sm:$0xf]
    %v818 = vld [vmem:[%s814 + $0xc] sm:$0xf]
    %s819 = scalar_lea.vmem %s4, 2
    %v820 = vld [vmem:[%s819] sm:$0x1]
    %v822 = vlaneseq
    %v823 = vshrl.u32 %v822, 7
    %v824 = vsub.s32 0, %v823
    %v825 = vrot.slane %v820, %v824
    %v831 = vunpack.c.l.b16 %v815
    %v832 = vunpack.c.l.b16 %v816
    %v833 = vunpack.c.l.b16 %v817
    %v834 = vunpack.c.l.b16 %v818
    %v835 = vpack.c.b16 %v832, %v831
    %v836 = vpack.c.b16 %v834, %v833
    %839 = vmatprep.subr.bf16.mxu0 0
    %840 = vmatpush1.bf16.msra.mxu0 %v835
    %841 = vmatprep.subr.bf16.mxu0 0
    %842 = vmatpush1.bf16.msra.mxu0 %v836
    %843 = vmatprep.subr.bf16.mxu0 0
    %844 = vmatpush1.bf16.msra.mxu0 0
    %845 = vmatprep.subr.bf16.mxu0 0
    %846 = vmatpush1.bf16.msra.mxu0 0
    %847 = vmatprep.subr.bf16.mxu0 0
    %848 = vmatpush1.bf16.msra.mxu0 0
    %849 = vmatprep.subr.bf16.mxu0 0
    %850 = vmatpush1.bf16.msra.mxu0 0
    %851 = vmatprep.subr.bf16.mxu0 0
    %852 = vmatpush1.bf16.msra.mxu0 0
    %853 = vmatprep.subr.bf16.mxu0 0
    %854 = vmatpush1.bf16.msra.mxu0 0
    %855 = vmatprep.subr.bf16.mxu0 0
    %856 = vmatpush1.bf16.msra.mxu0 0
    %857 = vmatprep.subr.bf16.mxu0 0
    %858 = vmatpush1.bf16.msra.mxu0 0
    %859 = vmatprep.subr.bf16.mxu0 0
    %860 = vmatpush1.bf16.msra.mxu0 0
    %861 = vmatprep.subr.bf16.mxu0 0
    %862 = vmatpush1.bf16.msra.mxu0 0
    %863 = vmatprep.subr.bf16.mxu0 0
    %864 = vmatpush1.bf16.msra.mxu0 0
    %865 = vmatprep.subr.bf16.mxu0 0
    %866 = vmatpush1.bf16.msra.mxu0 0
    %867 = vmatprep.subr.bf16.mxu0 0
    %868 = vmatpush1.bf16.msra.mxu0 0
    %869 = vmatprep.subr.bf16.mxu0 0
    %870 = vmatpush1.bf16.msra.mxu0 0
    %871 = vmatprep.mubr.bf16.mxu0 0
    %872 = vmatmul.mubr.bf16.gmra.mrb[0].mxu0 %v104
    %v873 = vpop.f32.mrb[0].mxu0
    %v874 = vadd.f32 %v825, %v873
    %v875 = vpop.f32.mrb[0].mxu0
    %v876 = vpop.f32.mrb[0].mxu0
    %v877 = vadd.f32 %v825, %v876
    %v878 = vpop.f32.mrb[0].mxu0
    %879 = vdwg.mxu0
    %s880 = scalar_lea.vmem %s2, 32
    %v881 = vld [vmem:[%s880] sm:$0xf]
    %v882 = vld [vmem:[%s880 + $0x4] sm:$0xf]
    %v883 = vld [vmem:[%s880 + $0x8] sm:$0xf]
    %v884 = vld [vmem:[%s880 + $0xc] sm:$0xf]
    %s885 = scalar_lea.vmem %s5, 2
    %v886 = vld [vmem:[%s885] sm:$0x1]
    %v888 = vlaneseq
    %v889 = vshrl.u32 %v888, 7
    %v890 = vsub.s32 0, %v889
    %v891 = vrot.slane %v886, %v890
    %v897 = vunpack.c.l.b16 %v881
    %v898 = vunpack.c.l.b16 %v882
    %v899 = vunpack.c.l.b16 %v883
    %v900 = vunpack.c.l.b16 %v884
    %v901 = vpack.c.b16 %v898, %v897
    %v902 = vpack.c.b16 %v900, %v899
    %905 = vmatprep.subr.bf16.mxu0 0
    %906 = vmatpush1.bf16.msra.mxu0 %v901
    %907 = vmatprep.subr.bf16.mxu0 0
    %908 = vmatpush1.bf16.msra.mxu0 %v902
    %909 = vmatprep.subr.bf16.mxu0 0
    %910 = vmatpush1.bf16.msra.mxu0 0
    %911 = vmatprep.subr.bf16.mxu0 0
    %912 = vmatpush1.bf16.msra.mxu0 0
    %913 = vmatprep.subr.bf16.mxu0 0
    %914 = vmatpush1.bf16.msra.mxu0 0
    %915 = vmatprep.subr.bf16.mxu0 0
    %916 = vmatpush1.bf16.msra.mxu0 0
    %917 = vmatprep.subr.bf16.mxu0 0
    %918 = vmatpush1.bf16.msra.mxu0 0
    %919 = vmatprep.subr.bf16.mxu0 0
    %920 = vmatpush1.bf16.msra.mxu0 0
    %921 = vmatprep.subr.bf16.mxu0 0
    %922 = vmatpush1.bf16.msra.mxu0 0
    %923 = vmatprep.subr.bf16.mxu0 0
    %924 = vmatpush1.bf16.msra.mxu0 0
    %925 = vmatprep.subr.bf16.mxu0 0
    %926 = vmatpush1.bf16.msra.mxu0 0
    %927 = vmatprep.subr.bf16.mxu0 0
    %928 = vmatpush1.bf16.msra.mxu0 0
    %929 = vmatprep.subr.bf16.mxu0 0
    %930 = vmatpush1.bf16.msra.mxu0 0
    %931 = vmatprep.subr.bf16.mxu0 0
    %932 = vmatpush1.bf16.msra.mxu0 0
    %933 = vmatprep.subr.bf16.mxu0 0
    %934 = vmatpush1.bf16.msra.mxu0 0
    %935 = vmatprep.subr.bf16.mxu0 0
    %936 = vmatpush1.bf16.msra.mxu0 0
    %937 = vmatprep.mubr.bf16.mxu0 0
    %938 = vmatmul.mubr.bf16.gmra.mrb[0].mxu0 %v104
    %v939 = vpop.f32.mrb[0].mxu0
    %v940 = vadd.f32 %v891, %v939
    %v941 = vpop.f32.mrb[0].mxu0
    %v942 = vpop.f32.mrb[0].mxu0
    %v943 = vadd.f32 %v891, %v942
    %v944 = vpop.f32.mrb[0].mxu0
    %945 = vdwg.mxu0
    %s946 = scalar_lea.vmem %s3, 32
    %v947 = vld [vmem:[%s946] sm:$0xf]
    %v948 = vld [vmem:[%s946 + $0x4] sm:$0xf]
    %v949 = vld [vmem:[%s946 + $0x8] sm:$0xf]
    %v950 = vld [vmem:[%s946 + $0xc] sm:$0xf]
    %s951 = scalar_lea.vmem %s6, 2
    %v952 = vld [vmem:[%s951] sm:$0x1]
    %v954 = vlaneseq
    %v955 = vshrl.u32 %v954, 7
    %v956 = vsub.s32 0, %v955
    %v957 = vrot.slane %v952, %v956
    %v963 = vunpack.c.l.b16 %v947
    %v964 = vunpack.c.l.b16 %v948
    %v965 = vunpack.c.l.b16 %v949
    %v966 = vunpack.c.l.b16 %v950
    %v967 = vpack.c.b16 %v964, %v963
    %v968 = vpack.c.b16 %v966, %v965
    %971 = vmatprep.subr.bf16.mxu0 0
    %972 = vmatpush1.bf16.msra.mxu0 %v967
    %973 = vmatprep.subr.bf16.mxu0 0
    %974 = vmatpush1.bf16.msra.mxu0 %v968
    %975 = vmatprep.subr.bf16.mxu0 0
    %976 = vmatpush1.bf16.msra.mxu0 0
    %977 = vmatprep.subr.bf16.mxu0 0
    %978 = vmatpush1.bf16.msra.mxu0 0
    %979 = vmatprep.subr.bf16.mxu0 0
    %980 = vmatpush1.bf16.msra.mxu0 0
    %981 = vmatprep.subr.bf16.mxu0 0
    %982 = vmatpush1.bf16.msra.mxu0 0
    %983 = vmatprep.subr.bf16.mxu0 0
    %984 = vmatpush1.bf16.msra.mxu0 0
    %985 = vmatprep.subr.bf16.mxu0 0
    %986 = vmatpush1.bf16.msra.mxu0 0
    %987 = vmatprep.subr.bf16.mxu0 0
    %988 = vmatpush1.bf16.msra.mxu0 0
    %989 = vmatprep.subr.bf16.mxu0 0
    %990 = vmatpush1.bf16.msra.mxu0 0
    %991 = vmatprep.subr.bf16.mxu0 0
    %992 = vmatpush1.bf16.msra.mxu0 0
    %993 = vmatprep.subr.bf16.mxu0 0
    %994 = vmatpush1.bf16.msra.mxu0 0
    %995 = vmatprep.subr.bf16.mxu0 0
    %996 = vmatpush1.bf16.msra.mxu0 0
    %997 = vmatprep.subr.bf16.mxu0 0
    %998 = vmatpush1.bf16.msra.mxu0 0
    %999 = vmatprep.subr.bf16.mxu0 0
    %1000 = vmatpush1.bf16.msra.mxu0 0
    %1001 = vmatprep.subr.bf16.mxu0 0
    %1002 = vmatpush1.bf16.msra.mxu0 0
    %1003 = vmatprep.mubr.bf16.mxu0 0
    %1004 = vmatmul.mubr.bf16.gmra.mrb[0].mxu0 %v104
    %v1005 = vpop.f32.mrb[0].mxu0
    %v1006 = vadd.f32 %v957, %v1005
    %v1007 = vpop.f32.mrb[0].mxu0
    %v1008 = vpop.f32.mrb[0].mxu0
    %v1009 = vadd.f32 %v957, %v1008
    %v1010 = vpop.f32.mrb[0].mxu0
    %1011 = vdwg.mxu0
    %v1012 = vpack.c.bf16 %v877, %v874
    %v1013 = vpack.c.bf16 %v943, %v940
    %s1014 = scalar_lea.vmem %s13, 32
    %v1015 = vld [vmem:[%s1014] sm:$0xff]
    %v1016 = vld [vmem:[%s1014 + $0x8] sm:$0xff]
    %v1018 = vsel %vm279, %v1012, 0
    %v1021 = vsel %vm279, %v1013, 0
    %1023 = vmatprep.subr.bf16.mxu0 0
    %1024 = vmatpush1.bf16.xpose.msra.mxu0 %v1021
    %1025 = vmatprep.subr.bf16.mxu0 0
    %1026 = vmatpush1.bf16.xpose.msra.mxu0 0
    %1027 = vmatprep.subr.bf16.mxu0 0
    %1028 = vmatpush1.bf16.xpose.msra.mxu0 0
    %1029 = vmatprep.subr.bf16.mxu0 0
    %1030 = vmatpush1.bf16.xpose.msra.mxu0 0
    %1031 = vmatprep.subr.bf16.mxu0 0
    %1032 = vmatpush1.bf16.xpose.msra.mxu0 0
    %1033 = vmatprep.subr.bf16.mxu0 0
    %1034 = vmatpush1.bf16.xpose.msra.mxu0 0
    %1035 = vmatprep.subr.bf16.mxu0 0
    %1036 = vmatpush1.bf16.xpose.msra.mxu0 0
    %1037 = vmatprep.subr.bf16.mxu0 0
    %1038 = vmatpush1.bf16.xpose.msra.mxu0 0
    %1039 = vmatprep.subr.bf16.mxu0 0
    %1040 = vmatpush1.bf16.xpose.msra.mxu0 0
    %1041 = vmatprep.subr.bf16.mxu0 0
    %1042 = vmatpush1.bf16.xpose.msra.mxu0 0
    %1043 = vmatprep.subr.bf16.mxu0 0
    %1044 = vmatpush1.bf16.xpose.msra.mxu0 0
    %1045 = vmatprep.subr.bf16.mxu0 0
    %1046 = vmatpush1.bf16.xpose.msra.mxu0 0
    %1047 = vmatprep.subr.bf16.mxu0 0
    %1048 = vmatpush1.bf16.xpose.msra.mxu0 0
    %1049 = vmatprep.subr.bf16.mxu0 0
    %1050 = vmatpush1.bf16.xpose.msra.mxu0 0
    %1051 = vmatprep.subr.bf16.mxu0 0
    %1052 = vmatpush1.bf16.xpose.msra.mxu0 0
    %1053 = vmatprep.subr.bf16.mxu0 0
    %1054 = vmatpush1.bf16.xpose.msra.mxu0 0
    %1055 = vmatprep.mubr.bf16.mxu0 0
    %1056 = vmatmul.mubr.bf16.gmra.mrb[0].mxu0 %v1018
    %v1057 = vpop.f32.mrb[0].mxu0
    %v1058 = vadd.f32 %v1015, %v1057
    %v1059 = vpop.f32.mrb[0].mxu0
    %v1060 = vpop.f32.mrb[0].mxu0
    %v1061 = vadd.f32 %v1016, %v1060
    %v1062 = vpop.f32.mrb[0].mxu0
    %1063 = vdwg.mxu0
    %v1064 = vsel %vm327, %v1058, -inf
    %1065 = vmax.xlane.f32.xlu0 %v1064
    %v1066 = vpop.xlane.xlu0 %1065
    %v1067 = vsel %vm327, %v1061, -inf
    %1068 = vmax.xlane.f32.xlu0 %v1067
    %v1069 = vpop.xlane.xlu0 %1068
    %v1070 = vsub.f32 %v1058, %v1066
    %v1071 = vsub.f32 %v1061, %v1069
    %v1072 = vmul.f32 %v1070, 1.442695
    %v1073 = vpow.pop %v1072
    %v1074 = vmul.f32 %v1071, 1.442695
    %v1075 = vpow.pop %v1074
    %v1076 = vsel %vm327, %v1073, 0.0
    %1077 = vadd.xlane.f32.xlu0 %v1076
    %v1078 = vpop.xlane.xlu0 %1077
    %v1079 = vsel %vm327, %v1075, 0.0
    %1080 = vadd.xlane.f32.xlu0 %v1079
    %v1081 = vpop.xlane.xlu0 %1080
    %v1082 = vrcp.pop %v1078
    %v1083 = vrcp.pop %v1081
    %v1084 = vmul.f32 %v1073, %v1082
    %v1085 = vmul.f32 %v1075, %v1083
    %v1086 = vpack.c.bf16 %v1085, %v1084
    %v1087 = vpack.c.bf16 %v1009, %v1006
    %v1089 = vsel %vm327, %v1086, 0
    %1091 = vmatprep.subr.bf16.mxu0 0
    %1092 = vmatpush1.bf16.msra.mxu0 %v1087
    %1093 = vmatprep.subr.bf16.mxu0 0
    %1094 = vmatpush1.bf16.msra.mxu0 0
    %1095 = vmatprep.subr.bf16.mxu0 0
    %1096 = vmatpush1.bf16.msra.mxu0 0
    %1097 = vmatprep.subr.bf16.mxu0 0
    %1098 = vmatpush1.bf16.msra.mxu0 0
    %1099 = vmatprep.subr.bf16.mxu0 0
    %1100 = vmatpush1.bf16.msra.mxu0 0
    %1101 = vmatprep.subr.bf16.mxu0 0
    %1102 = vmatpush1.bf16.msra.mxu0 0
    %1103 = vmatprep.subr.bf16.mxu0 0
    %1104 = vmatpush1.bf16.msra.mxu0 0
    %1105 = vmatprep.subr.bf16.mxu0 0
    %1106 = vmatpush1.bf16.msra.mxu0 0
    %1107 = vmatprep.subr.bf16.mxu0 0
    %1108 = vmatpush1.bf16.msra.mxu0 0
    %1109 = vmatprep.subr.bf16.mxu0 0
    %1110 = vmatpush1.bf16.msra.mxu0 0
    %1111 = vmatprep.subr.bf16.mxu0 0
    %1112 = vmatpush1.bf16.msra.mxu0 0
    %1113 = vmatprep.subr.bf16.mxu0 0
    %1114 = vmatpush1.bf16.msra.mxu0 0
    %1115 = vmatprep.subr.bf16.mxu0 0
    %1116 = vmatpush1.bf16.msra.mxu0 0
    %1117 = vmatprep.subr.bf16.mxu0 0
    %1118 = vmatpush1.bf16.msra.mxu0 0
    %1119 = vmatprep.subr.bf16.mxu0 0
    %1120 = vmatpush1.bf16.msra.mxu0 0
    %1121 = vmatprep.subr.bf16.mxu0 0
    %1122 = vmatpush1.bf16.msra.mxu0 0
    %1123 = vmatprep.mubr.bf16.mxu0 0
    %1124 = vmatmul.mubr.bf16.gmra.mrb[0].mxu0 %v1089
    %v1125 = vpop.f32.mrb[0].mxu0
    %v1126 = vadd.f32 0.0, %v1125
    %v1127 = vpop.f32.mrb[0].mxu0
    %v1128 = vpop.f32.mrb[0].mxu0
    %v1129 = vadd.f32 0.0, %v1128
    %v1130 = vpop.f32.mrb[0].mxu0
    %1131 = vdwg.mxu0
    %v1132 = vpack.c.bf16 %v1129, %v1126
    %s1133 = scalar_lea.vmem %s7, 8
    %v1134 = vld [vmem:[%s1133] sm:$0xf]
    %v1136 = vsel %vm279, %v1132, 0
    %v1139 = vsel %vm722, %v1134, 0
    %1141 = vmatprep.subr.bf16.mxu0 0
    %1142 = vmatpush1.bf16.msra.mxu0 %v1139
    %1143 = vmatprep.subr.bf16.mxu0 0
    %1144 = vmatpush1.bf16.msra.mxu0 0
    %1145 = vmatprep.subr.bf16.mxu0 0
    %1146 = vmatpush1.bf16.msra.mxu0 0
    %1147 = vmatprep.subr.bf16.mxu0 0
    %1148 = vmatpush1.bf16.msra.mxu0 0
    %1149 = vmatprep.subr.bf16.mxu0 0
    %1150 = vmatpush1.bf16.msra.mxu0 0
    %1151 = vmatprep.subr.bf16.mxu0 0
    %1152 = vmatpush1.bf16.msra.mxu0 0
    %1153 = vmatprep.subr.bf16.mxu0 0
    %1154 = vmatpush1.bf16.msra.mxu0 0
    %1155 = vmatprep.subr.bf16.mxu0 0
    %1156 = vmatpush1.bf16.msra.mxu0 0
    %1157 = vmatprep.subr.bf16.mxu0 0
    %1158 = vmatpush1.bf16.msra.mxu0 0
    %1159 = vmatprep.subr.bf16.mxu0 0
    %1160 = vmatpush1.bf16.msra.mxu0 0
    %1161 = vmatprep.subr.bf16.mxu0 0
    %1162 = vmatpush1.bf16.msra.mxu0 0
    %1163 = vmatprep.subr.bf16.mxu0 0
    %1164 = vmatpush1.bf16.msra.mxu0 0
    %1165 = vmatprep.subr.bf16.mxu0 0
    %1166 = vmatpush1.bf16.msra.mxu0 0
    %1167 = vmatprep.subr.bf16.mxu0 0
    %1168 = vmatpush1.bf16.msra.mxu0 0
    %1169 = vmatprep.subr.bf16.mxu0 0
    %1170 = vmatpush1.bf16.msra.mxu0 0
    %1171 = vmatprep.subr.bf16.mxu0 0
    %1172 = vmatpush1.bf16.msra.mxu0 0
    %1173 = vmatprep.mubr.bf16.mxu0 0
    %1174 = vmatmul.mubr.bf16.gmra.mrb[0].mxu0 %v1136
    %v1175 = vpop.f32.mrb[0].mxu0
    %v1176 = vadd.f32 0.0, %v1175
    %v1177 = vpop.f32.mrb[0].mxu0
    %v1178 = vpop.f32.mrb[0].mxu0
    %v1179 = vadd.f32 0.0, %v1178
    %v1180 = vpop.f32.mrb[0].mxu0
    %1181 = vdwg.mxu0
    %v1182 = vadd.f32 %v808, %v1176
    %v1183 = vadd.f32 %v811, %v1179
    %s1184 = scalar_lea.vmem %s1, 48
    %v1185 = vld [vmem:[%s1184] sm:$0xf]
    %v1186 = vld [vmem:[%s1184 + $0x4] sm:$0xf]
    %v1187 = vld [vmem:[%s1184 + $0x8] sm:$0xf]
    %v1188 = vld [vmem:[%s1184 + $0xc] sm:$0xf]
    %s1189 = scalar_lea.vmem %s4, 3
    %v1190 = vld [vmem:[%s1189] sm:$0x1]
    %v1192 = vlaneseq
    %v1193 = vshrl.u32 %v1192, 7
    %v1194 = vsub.s32 0, %v1193
    %v1195 = vrot.slane %v1190, %v1194
    %v1201 = vunpack.c.l.b16 %v1185
    %v1202 = vunpack.c.l.b16 %v1186
    %v1203 = vunpack.c.l.b16 %v1187
    %v1204 = vunpack.c.l.b16 %v1188
    %v1205 = vpack.c.b16 %v1202, %v1201
    %v1206 = vpack.c.b16 %v1204, %v1203
    %1209 = vmatprep.subr.bf16.mxu0 0
    %1210 = vmatpush1.bf16.msra.mxu0 %v1205
    %1211 = vmatprep.subr.bf16.mxu0 0
    %1212 = vmatpush1.bf16.msra.mxu0 %v1206
    %1213 = vmatprep.subr.bf16.mxu0 0
    %1214 = vmatpush1.bf16.msra.mxu0 0
    %1215 = vmatprep.subr.bf16.mxu0 0
    %1216 = vmatpush1.bf16.msra.mxu0 0
    %1217 = vmatprep.subr.bf16.mxu0 0
    %1218 = vmatpush1.bf16.msra.mxu0 0
    %1219 = vmatprep.subr.bf16.mxu0 0
    %1220 = vmatpush1.bf16.msra.mxu0 0
    %1221 = vmatprep.subr.bf16.mxu0 0
    %1222 = vmatpush1.bf16.msra.mxu0 0
    %1223 = vmatprep.subr.bf16.mxu0 0
    %1224 = vmatpush1.bf16.msra.mxu0 0
    %1225 = vmatprep.subr.bf16.mxu0 0
    %1226 = vmatpush1.bf16.msra.mxu0 0
    %1227 = vmatprep.subr.bf16.mxu0 0
    %1228 = vmatpush1.bf16.msra.mxu0 0
    %1229 = vmatprep.subr.bf16.mxu0 0
    %1230 = vmatpush1.bf16.msra.mxu0 0
    %1231 = vmatprep.subr.bf16.mxu0 0
    %1232 = vmatpush1.bf16.msra.mxu0 0
    %1233 = vmatprep.subr.bf16.mxu0 0
    %1234 = vmatpush1.bf16.msra.mxu0 0
    %1235 = vmatprep.subr.bf16.mxu0 0
    %1236 = vmatpush1.bf16.msra.mxu0 0
    %1237 = vmatprep.subr.bf16.mxu0 0
    %1238 = vmatpush1.bf16.msra.mxu0 0
    %1239 = vmatprep.subr.bf16.mxu0 0
    %1240 = vmatpush1.bf16.msra.mxu0 0
    %1241 = vmatprep.mubr.bf16.mxu0 0
    %1242 = vmatmul.mubr.bf16.gmra.mrb[0].mxu0 %v104
    %v1243 = vpop.f32.mrb[0].mxu0
    %v1244 = vadd.f32 %v1195, %v1243
    %v1245 = vpop.f32.mrb[0].mxu0
    %v1246 = vpop.f32.mrb[0].mxu0
    %v1247 = vadd.f32 %v1195, %v1246
    %v1248 = vpop.f32.mrb[0].mxu0
    %1249 = vdwg.mxu0
    %s1250 = scalar_lea.vmem %s2, 48
    %v1251 = vld [vmem:[%s1250] sm:$0xf]
    %v1252 = vld [vmem:[%s1250 + $0x4] sm:$0xf]
    %v1253 = vld [vmem:[%s1250 + $0x8] sm:$0xf]
    %v1254 = vld [vmem:[%s1250 + $0xc] sm:$0xf]
    %s1255 = scalar_lea.vmem %s5, 3
    %v1256 = vld [vmem:[%s1255] sm:$0x1]
    %v1258 = vlaneseq
    %v1259 = vshrl.u32 %v1258, 7
    %v1260 = vsub.s32 0, %v1259
    %v1261 = vrot.slane %v1256, %v1260
    %v1267 = vunpack.c.l.b16 %v1251
    %v1268 = vunpack.c.l.b16 %v1252
    %v1269 = vunpack.c.l.b16 %v1253
    %v1270 = vunpack.c.l.b16 %v1254
    %v1271 = vpack.c.b16 %v1268, %v1267
    %v1272 = vpack.c.b16 %v1270, %v1269
    %1275 = vmatprep.subr.bf16.mxu0 0
    %1276 = vmatpush1.bf16.msra.mxu0 %v1271
    %1277 = vmatprep.subr.bf16.mxu0 0
    %1278 = vmatpush1.bf16.msra.mxu0 %v1272
    %1279 = vmatprep.subr.bf16.mxu0 0
    %1280 = vmatpush1.bf16.msra.mxu0 0
    %1281 = vmatprep.subr.bf16.mxu0 0
    %1282 = vmatpush1.bf16.msra.mxu0 0
    %1283 = vmatprep.subr.bf16.mxu0 0
    %1284 = vmatpush1.bf16.msra.mxu0 0
    %1285 = vmatprep.subr.bf16.mxu0 0
    %1286 = vmatpush1.bf16.msra.mxu0 0
    %1287 = vmatprep.subr.bf16.mxu0 0
    %1288 = vmatpush1.bf16.msra.mxu0 0
    %1289 = vmatprep.subr.bf16.mxu0 0
    %1290 = vmatpush1.bf16.msra.mxu0 0
    %1291 = vmatprep.subr.bf16.mxu0 0
    %1292 = vmatpush1.bf16.msra.mxu0 0
    %1293 = vmatprep.subr.bf16.mxu0 0
    %1294 = vmatpush1.bf16.msra.mxu0 0
    %1295 = vmatprep.subr.bf16.mxu0 0
    %1296 = vmatpush1.bf16.msra.mxu0 0
    %1297 = vmatprep.subr.bf16.mxu0 0
    %1298 = vmatpush1.bf16.msra.mxu0 0
    %1299 = vmatprep.subr.bf16.mxu0 0
    %1300 = vmatpush1.bf16.msra.mxu0 0
    %1301 = vmatprep.subr.bf16.mxu0 0
    %1302 = vmatpush1.bf16.msra.mxu0 0
    %1303 = vmatprep.subr.bf16.mxu0 0
    %1304 = vmatpush1.bf16.msra.mxu0 0
    %1305 = vmatprep.subr.bf16.mxu0 0
    %1306 = vmatpush1.bf16.msra.mxu0 0
    %1307 = vmatprep.mubr.bf16.mxu0 0
    %1308 = vmatmul.mubr.bf16.gmra.mrb[0].mxu0 %v104
    %v1309 = vpop.f32.mrb[0].mxu0
    %v1310 = vadd.f32 %v1261, %v1309
    %v1311 = vpop.f32.mrb[0].mxu0
    %v1312 = vpop.f32.mrb[0].mxu0
    %v1313 = vadd.f32 %v1261, %v1312
    %v1314 = vpop.f32.mrb[0].mxu0
    %1315 = vdwg.mxu0
    %s1316 = scalar_lea.vmem %s3, 48
    %v1317 = vld [vmem:[%s1316] sm:$0xf]
    %v1318 = vld [vmem:[%s1316 + $0x4] sm:$0xf]
    %v1319 = vld [vmem:[%s1316 + $0x8] sm:$0xf]
    %v1320 = vld [vmem:[%s1316 + $0xc] sm:$0xf]
    %s1321 = scalar_lea.vmem %s6, 3
    %v1322 = vld [vmem:[%s1321] sm:$0x1]
    %v1324 = vlaneseq
    %v1325 = vshrl.u32 %v1324, 7
    %v1326 = vsub.s32 0, %v1325
    %v1327 = vrot.slane %v1322, %v1326
    %v1333 = vunpack.c.l.b16 %v1317
    %v1334 = vunpack.c.l.b16 %v1318
    %v1335 = vunpack.c.l.b16 %v1319
    %v1336 = vunpack.c.l.b16 %v1320
    %v1337 = vpack.c.b16 %v1334, %v1333
    %v1338 = vpack.c.b16 %v1336, %v1335
    %1341 = vmatprep.subr.bf16.mxu0 0
    %1342 = vmatpush1.bf16.msra.mxu0 %v1337
    %1343 = vmatprep.subr.bf16.mxu0 0
    %1344 = vmatpush1.bf16.msra.mxu0 %v1338
    %1345 = vmatprep.subr.bf16.mxu0 0
    %1346 = vmatpush1.bf16.msra.mxu0 0
    %1347 = vmatprep.subr.bf16.mxu0 0
    %1348 = vmatpush1.bf16.msra.mxu0 0
    %1349 = vmatprep.subr.bf16.mxu0 0
    %1350 = vmatpush1.bf16.msra.mxu0 0
    %1351 = vmatprep.subr.bf16.mxu0 0
    %1352 = vmatpush1.bf16.msra.mxu0 0
    %1353 = vmatprep.subr.bf16.mxu0 0
    %1354 = vmatpush1.bf16.msra.mxu0 0
    %1355 = vmatprep.subr.bf16.mxu0 0
    %1356 = vmatpush1.bf16.msra.mxu0 0
    %1357 = vmatprep.subr.bf16.mxu0 0
    %1358 = vmatpush1.bf16.msra.mxu0 0
    %1359 = vmatprep.subr.bf16.mxu0 0
    %1360 = vmatpush1.bf16.msra.mxu0 0
    %1361 = vmatprep.subr.bf16.mxu0 0
    %1362 = vmatpush1.bf16.msra.mxu0 0
    %1363 = vmatprep.subr.bf16.mxu0 0
    %1364 = vmatpush1.bf16.msra.mxu0 0
    %1365 = vmatprep.subr.bf16.mxu0 0
    %1366 = vmatpush1.bf16.msra.mxu0 0
    %1367 = vmatprep.subr.bf16.mxu0 0
    %1368 = vmatpush1.bf16.msra.mxu0 0
    %1369 = vmatprep.subr.bf16.mxu0 0
    %1370 = vmatpush1.bf16.msra.mxu0 0
    %1371 = vmatprep.subr.bf16.mxu0 0
    %1372 = vmatpush1.bf16.msra.mxu0 0
    %1373 = vmatprep.mubr.bf16.mxu0 0
    %1374 = vmatmul.mubr.bf16.gmra.mrb[0].mxu0 %v104
    %v1375 = vpop.f32.mrb[0].mxu0
    %v1376 = vadd.f32 %v1327, %v1375
    %v1377 = vpop.f32.mrb[0].mxu0
    %v1378 = vpop.f32.mrb[0].mxu0
    %v1379 = vadd.f32 %v1327, %v1378
    %v1380 = vpop.f32.mrb[0].mxu0
    %1381 = vdwg.mxu0
    %v1382 = vpack.c.bf16 %v1247, %v1244
    %v1383 = vpack.c.bf16 %v1313, %v1310
    %s1384 = scalar_lea.vmem %s13, 48
    %v1385 = vld [vmem:[%s1384] sm:$0xff]
    %v1386 = vld [vmem:[%s1384 + $0x8] sm:$0xff]
    %v1388 = vsel %vm279, %v1382, 0
    %v1391 = vsel %vm279, %v1383, 0
    %1393 = vmatprep.subr.bf16.mxu0 0
    %1394 = vmatpush1.bf16.xpose.msra.mxu0 %v1391
    %1395 = vmatprep.subr.bf16.mxu0 0
    %1396 = vmatpush1.bf16.xpose.msra.mxu0 0
    %1397 = vmatprep.subr.bf16.mxu0 0
    %1398 = vmatpush1.bf16.xpose.msra.mxu0 0
    %1399 = vmatprep.subr.bf16.mxu0 0
    %1400 = vmatpush1.bf16.xpose.msra.mxu0 0
    %1401 = vmatprep.subr.bf16.mxu0 0
    %1402 = vmatpush1.bf16.xpose.msra.mxu0 0
    %1403 = vmatprep.subr.bf16.mxu0 0
    %1404 = vmatpush1.bf16.xpose.msra.mxu0 0
    %1405 = vmatprep.subr.bf16.mxu0 0
    %1406 = vmatpush1.bf16.xpose.msra.mxu0 0
    %1407 = vmatprep.subr.bf16.mxu0 0
    %1408 = vmatpush1.bf16.xpose.msra.mxu0 0
    %1409 = vmatprep.subr.bf16.mxu0 0
    %1410 = vmatpush1.bf16.xpose.msra.mxu0 0
    %1411 = vmatprep.subr.bf16.mxu0 0
    %1412 = vmatpush1.bf16.xpose.msra.mxu0 0
    %1413 = vmatprep.subr.bf16.mxu0 0
    %1414 = vmatpush1.bf16.xpose.msra.mxu0 0
    %1415 = vmatprep.subr.bf16.mxu0 0
    %1416 = vmatpush1.bf16.xpose.msra.mxu0 0
    %1417 = vmatprep.subr.bf16.mxu0 0
    %1418 = vmatpush1.bf16.xpose.msra.mxu0 0
    %1419 = vmatprep.subr.bf16.mxu0 0
    %1420 = vmatpush1.bf16.xpose.msra.mxu0 0
    %1421 = vmatprep.subr.bf16.mxu0 0
    %1422 = vmatpush1.bf16.xpose.msra.mxu0 0
    %1423 = vmatprep.subr.bf16.mxu0 0
    %1424 = vmatpush1.bf16.xpose.msra.mxu0 0
    %1425 = vmatprep.mubr.bf16.mxu0 0
    %1426 = vmatmul.mubr.bf16.gmra.mrb[0].mxu0 %v1388
    %v1427 = vpop.f32.mrb[0].mxu0
    %v1428 = vadd.f32 %v1385, %v1427
    %v1429 = vpop.f32.mrb[0].mxu0
    %v1430 = vpop.f32.mrb[0].mxu0
    %v1431 = vadd.f32 %v1386, %v1430
    %v1432 = vpop.f32.mrb[0].mxu0
    %1433 = vdwg.mxu0
    %v1434 = vsel %vm327, %v1428, -inf
    %1435 = vmax.xlane.f32.xlu0 %v1434
    %v1436 = vpop.xlane.xlu0 %1435
    %v1437 = vsel %vm327, %v1431, -inf
    %1438 = vmax.xlane.f32.xlu0 %v1437
    %v1439 = vpop.xlane.xlu0 %1438
    %v1440 = vsub.f32 %v1428, %v1436
    %v1441 = vsub.f32 %v1431, %v1439
    %v1442 = vmul.f32 %v1440, 1.442695
    %v1443 = vpow.pop %v1442
    %v1444 = vmul.f32 %v1441, 1.442695
    %v1445 = vpow.pop %v1444
    %v1446 = vsel %vm327, %v1443, 0.0
    %1447 = vadd.xlane.f32.xlu0 %v1446
    %v1448 = vpop.xlane.xlu0 %1447
    %v1449 = vsel %vm327, %v1445, 0.0
    %1450 = vadd.xlane.f32.xlu0 %v1449
    %v1451 = vpop.xlane.xlu0 %1450
    %v1452 = vrcp.pop %v1448
    %v1453 = vrcp.pop %v1451
    %v1454 = vmul.f32 %v1443, %v1452
    %v1455 = vmul.f32 %v1445, %v1453
    %v1456 = vpack.c.bf16 %v1455, %v1454
    %v1457 = vpack.c.bf16 %v1379, %v1376
    %v1459 = vsel %vm327, %v1456, 0
    %1461 = vmatprep.subr.bf16.mxu0 0
    %1462 = vmatpush1.bf16.msra.mxu0 %v1457
    %1463 = vmatprep.subr.bf16.mxu0 0
    %1464 = vmatpush1.bf16.msra.mxu0 0
    %1465 = vmatprep.subr.bf16.mxu0 0
    %1466 = vmatpush1.bf16.msra.mxu0 0
    %1467 = vmatprep.subr.bf16.mxu0 0
    %1468 = vmatpush1.bf16.msra.mxu0 0
    %1469 = vmatprep.subr.bf16.mxu0 0
    %1470 = vmatpush1.bf16.msra.mxu0 0
    %1471 = vmatprep.subr.bf16.mxu0 0
    %1472 = vmatpush1.bf16.msra.mxu0 0
    %1473 = vmatprep.subr.bf16.mxu0 0
    %1474 = vmatpush1.bf16.msra.mxu0 0
    %1475 = vmatprep.subr.bf16.mxu0 0
    %1476 = vmatpush1.bf16.msra.mxu0 0
    %1477 = vmatprep.subr.bf16.mxu0 0
    %1478 = vmatpush1.bf16.msra.mxu0 0
    %1479 = vmatprep.subr.bf16.mxu0 0
    %1480 = vmatpush1.bf16.msra.mxu0 0
    %1481 = vmatprep.subr.bf16.mxu0 0
    %1482 = vmatpush1.bf16.msra.mxu0 0
    %1483 = vmatprep.subr.bf16.mxu0 0
    %1484 = vmatpush1.bf16.msra.mxu0 0
    %1485 = vmatprep.subr.bf16.mxu0 0
    %1486 = vmatpush1.bf16.msra.mxu0 0
    %1487 = vmatprep.subr.bf16.mxu0 0
    %1488 = vmatpush1.bf16.msra.mxu0 0
    %1489 = vmatprep.subr.bf16.mxu0 0
    %1490 = vmatpush1.bf16.msra.mxu0 0
    %1491 = vmatprep.subr.bf16.mxu0 0
    %1492 = vmatpush1.bf16.msra.mxu0 0
    %1493 = vmatprep.mubr.bf16.mxu0 0
    %1494 = vmatmul.mubr.bf16.gmra.mrb[0].mxu0 %v1459
    %v1495 = vpop.f32.mrb[0].mxu0
    %v1496 = vadd.f32 0.0, %v1495
    %v1497 = vpop.f32.mrb[0].mxu0
    %v1498 = vpop.f32.mrb[0].mxu0
    %v1499 = vadd.f32 0.0, %v1498
    %v1500 = vpop.f32.mrb[0].mxu0
    %1501 = vdwg.mxu0
    %v1502 = vpack.c.bf16 %v1499, %v1496
    %s1503 = scalar_lea.vmem %s7, 12
    %v1504 = vld [vmem:[%s1503] sm:$0xf]
    %v1506 = vsel %vm279, %v1502, 0
    %v1509 = vsel %vm722, %v1504, 0
    %1511 = vmatprep.subr.bf16.mxu0 0
    %1512 = vmatpush1.bf16.msra.mxu0 %v1509
    %1513 = vmatprep.subr.bf16.mxu0 0
    %1514 = vmatpush1.bf16.msra.mxu0 0
    %1515 = vmatprep.subr.bf16.mxu0 0
    %1516 = vmatpush1.bf16.msra.mxu0 0
    %1517 = vmatprep.subr.bf16.mxu0 0
    %1518 = vmatpush1.bf16.msra.mxu0 0
    %1519 = vmatprep.subr.bf16.mxu0 0
    %1520 = vmatpush1.bf16.msra.mxu0 0
    %1521 = vmatprep.subr.bf16.mxu0 0
    %1522 = vmatpush1.bf16.msra.mxu0 0
    %1523 = vmatprep.subr.bf16.mxu0 0
    %1524 = vmatpush1.bf16.msra.mxu0 0
    %1525 = vmatprep.subr.bf16.mxu0 0
    %1526 = vmatpush1.bf16.msra.mxu0 0
    %1527 = vmatprep.subr.bf16.mxu0 0
    %1528 = vmatpush1.bf16.msra.mxu0 0
    %1529 = vmatprep.subr.bf16.mxu0 0
    %1530 = vmatpush1.bf16.msra.mxu0 0
    %1531 = vmatprep.subr.bf16.mxu0 0
    %1532 = vmatpush1.bf16.msra.mxu0 0
    %1533 = vmatprep.subr.bf16.mxu0 0
    %1534 = vmatpush1.bf16.msra.mxu0 0
    %1535 = vmatprep.subr.bf16.mxu0 0
    %1536 = vmatpush1.bf16.msra.mxu0 0
    %1537 = vmatprep.subr.bf16.mxu0 0
    %1538 = vmatpush1.bf16.msra.mxu0 0
    %1539 = vmatprep.subr.bf16.mxu0 0
    %1540 = vmatpush1.bf16.msra.mxu0 0
    %1541 = vmatprep.subr.bf16.mxu0 0
    %1542 = vmatpush1.bf16.msra.mxu0 0
    %1543 = vmatprep.mubr.bf16.mxu0 0
    %1544 = vmatmul.mubr.bf16.gmra.mrb[0].mxu0 %v1506
    %v1545 = vpop.f32.mrb[0].mxu0
    %v1546 = vadd.f32 0.0, %v1545
    %v1547 = vpop.f32.mrb[0].mxu0
    %v1548 = vpop.f32.mrb[0].mxu0
    %v1549 = vadd.f32 0.0, %v1548
    %v1550 = vpop.f32.mrb[0].mxu0
    %1551 = vdwg.mxu0
    %v1552 = vadd.f32 %v1182, %v1546
    %v1553 = vadd.f32 %v1183, %v1549
    %v1554 = vadd.f32 %v49, %v1552
    %v1555 = vadd.f32 %v50, %v1553
    %v1556 = vld [vmem:[%s8] sm:$0x1]
    %v1558 = vlaneseq
    %v1559 = vshrl.u32 %v1558, 7
    %v1560 = vsub.s32 0, %v1559
    %v1561 = vrot.slane %v1556, %v1560
    %v1563 = vadd.f32 %v1554, %v1561
    %v1564 = vadd.f32 %v1555, %v1561
    %v1565 = vpack.c.bf16 %v1564, %v1563
    %v1566 = vld [vmem:[%s9] sm:$0xff]
    %v1567 = vld [vmem:[%s9 + $0x8] sm:$0xff]
    %v1568 = vld [vmem:[%s9 + $0x10] sm:$0xff]
    %v1569 = vld [vmem:[%s9 + $0x18] sm:$0xff]
    %v1570 = vld [vmem:[%s10] sm:$0x3]
    %v1572 = vlaneseq
    %v1573 = vshrl.u32 %v1572, 7
    %v1574 = vsub.s32 0, %v1573
    %v1575 = vrot.slane %v1570, %v1574
    %v1576 = vlaneseq
    %v1577 = vshrl.u32 %v1576, 7
    %v1578 = vsub.s32 1, %v1577
    %v1579 = vrot.slane %v1570, %v1578
    %v1586 = vunpack.c.l.b16 %v1566
    %v1587 = vunpack.c.h.b16 %v1566
    %v1588 = vunpack.c.l.b16 %v1567
    %v1589 = vunpack.c.h.b16 %v1567
    %v1590 = vunpack.c.l.b16 %v1568
    %v1591 = vunpack.c.h.b16 %v1568
    %v1592 = vunpack.c.l.b16 %v1569
    %v1593 = vunpack.c.h.b16 %v1569
    %v1594 = vpack.c.b16 %v1588, %v1586
    %v1595 = vpack.c.b16 %v1589, %v1587
    %v1596 = vpack.c.b16 %v1592, %v1590
    %v1597 = vpack.c.b16 %v1593, %v1591
    %v1603 = vsel %vm51, %v1565, 0
    %1605 = vmatprep.subr.bf16.mxu0 %v1595
    %1606 = vmatpush1.bf16.msra.mxu0 %v1594
    %1607 = vmatprep.subr.bf16.mxu0 %v1597
    %1608 = vmatpush1.bf16.msra.mxu0 %v1596
    %1609 = vmatprep.subr.bf16.mxu0 0
    %1610 = vmatpush1.bf16.msra.mxu0 0
    %1611 = vmatprep.subr.bf16.mxu0 0
    %1612 = vmatpush1.bf16.msra.mxu0 0
    %1613 = vmatprep.subr.bf16.mxu0 0
    %1614 = vmatpush1.bf16.msra.mxu0 0
    %1615 = vmatprep.subr.bf16.mxu0 0
    %1616 = vmatpush1.bf16.msra.mxu0 0
    %1617 = vmatprep.subr.bf16.mxu0 0
    %1618 = vmatpush1.bf16.msra.mxu0 0
    %1619 = vmatprep.subr.bf16.mxu0 0
    %1620 = vmatpush1.bf16.msra.mxu0 0
    %1621 = vmatprep.subr.bf16.mxu0 0
    %1622 = vmatpush1.bf16.msra.mxu0 0
    %1623 = vmatprep.subr.bf16.mxu0 0
    %1624 = vmatpush1.bf16.msra.mxu0 0
    %1625 = vmatprep.subr.bf16.mxu0 0
    %1626 = vmatpush1.bf16.msra.mxu0 0
    %1627 = vmatprep.subr.bf16.mxu0 0
    %1628 = vmatpush1.bf16.msra.mxu0 0
    %1629 = vmatprep.subr.bf16.mxu0 0
    %1630 = vmatpush1.bf16.msra.mxu0 0
    %1631 = vmatprep.subr.bf16.mxu0 0
    %1632 = vmatpush1.bf16.msra.mxu0 0
    %1633 = vmatprep.subr.bf16.mxu0 0
    %1634 = vmatpush1.bf16.msra.mxu0 0
    %1635 = vmatprep.subr.bf16.mxu0 0
    %1636 = vmatpush1.bf16.msra.mxu0 0
    %1637 = vmatprep.mubr.bf16.mxu0 0
    %1638 = vmatmul.mubr.bf16.gmra.mrb[0].mxu0 %v1603
    %v1639 = vpop.f32.mrb[0].mxu0
    %v1640 = vadd.f32 %v1575, %v1639
    %v1641 = vpop.f32.mrb[0].mxu0
    %v1642 = vadd.f32 %v1579, %v1641
    %v1643 = vpop.f32.mrb[0].mxu0
    %v1644 = vadd.f32 %v1575, %v1643
    %v1645 = vpop.f32.mrb[0].mxu0
    %v1646 = vadd.f32 %v1579, %v1645
    %1647 = vdwg.mxu0
    %v1648 = vxor.u32 %v1640, 2147483648
    %v1649 = vxor.u32 %v1644, 2147483648
    %v1650 = vmul.f32 %v1648, 1.442695
    %v1651 = vpow.pop %v1650
    %v1652 = vmul.f32 %v1649, 1.442695
    %v1653 = vpow.pop %v1652
    %v1654 = vadd.f32 %v1651, 1.0
    %v1655 = vadd.f32 %v1653, 1.0
    %v1656 = vrcp.pop %v1654
    %v1657 = vmul.f32 1.0, %v1656
    %v1658 = vrcp.pop %v1655
    %v1659 = vmul.f32 1.0, %v1658
    %v1660 = vmul.f32 %v1640, %v1657
    %v1661 = vmul.f32 %v1644, %v1659
    %v1662 = vmul.f32 %v1660, %v1642
    %v1663 = vmul.f32 %v1661, %v1646
    %v1664 = vpack.c.bf16 %v1663, %v1662
    %v1665 = vld [vmem:[%s11] sm:$0xf]
    %v1666 = vld [vmem:[%s11 + $0x4] sm:$0xf]
    %v1667 = vld [vmem:[%s11 + $0x8] sm:$0xf]
    %v1668 = vld [vmem:[%s11 + $0xc] sm:$0xf]
    %v1669 = vld [vmem:[%s11 + $0x10] sm:$0xf]
    %v1670 = vld [vmem:[%s11 + $0x14] sm:$0xf]
    %v1671 = vld [vmem:[%s11 + $0x18] sm:$0xf]
    %v1672 = vld [vmem:[%s11 + $0x1c] sm:$0xf]
    %v1673 = vld [vmem:[%s11 + $0x20] sm:$0xf]
    %v1674 = vld [vmem:[%s11 + $0x24] sm:$0xf]
    %v1675 = vld [vmem:[%s11 + $0x28] sm:$0xf]
    %v1676 = vld [vmem:[%s11 + $0x2c] sm:$0xf]
    %v1677 = vld [vmem:[%s11 + $0x30] sm:$0xf]
    %v1678 = vld [vmem:[%s11 + $0x34] sm:$0xf]
    %v1679 = vld [vmem:[%s11 + $0x38] sm:$0xf]
    %v1680 = vld [vmem:[%s11 + $0x3c] sm:$0xf]
    %v1681 = vld [vmem:[%s12] sm:$0x1]
    %v1683 = vlaneseq
    %v1684 = vshrl.u32 %v1683, 7
    %v1685 = vsub.s32 0, %v1684
    %v1686 = vrot.slane %v1681, %v1685
    %v1704 = vunpack.c.l.b16 %v1665
    %v1705 = vunpack.c.l.b16 %v1666
    %v1706 = vunpack.c.l.b16 %v1667
    %v1707 = vunpack.c.l.b16 %v1668
    %v1708 = vunpack.c.l.b16 %v1669
    %v1709 = vunpack.c.l.b16 %v1670
    %v1710 = vunpack.c.l.b16 %v1671
    %v1711 = vunpack.c.l.b16 %v1672
    %v1712 = vunpack.c.l.b16 %v1673
    %v1713 = vunpack.c.l.b16 %v1674
    %v1714 = vunpack.c.l.b16 %v1675
    %v1715 = vunpack.c.l.b16 %v1676
    %v1716 = vunpack.c.l.b16 %v1677
    %v1717 = vunpack.c.l.b16 %v1678
    %v1718 = vunpack.c.l.b16 %v1679
    %v1719 = vunpack.c.l.b16 %v1680
    %v1720 = vpack.c.b16 %v1705, %v1704
    %v1721 = vpack.c.b16 %v1707, %v1706
    %v1722 = vpack.c.b16 %v1709, %v1708
    %v1723 = vpack.c.b16 %v1711, %v1710
    %v1724 = vpack.c.b16 %v1713, %v1712
    %v1725 = vpack.c.b16 %v1715, %v1714
    %v1726 = vpack.c.b16 %v1717, %v1716
    %v1727 = vpack.c.b16 %v1719, %v1718
    %1736 = vmatprep.subr.bf16.mxu0 0
    %1737 = vmatpush1.bf16.msra.mxu0 %v1720
    %1738 = vmatprep.subr.bf16.mxu0 0
    %1739 = vmatpush1.bf16.msra.mxu0 %v1721
    %1740 = vmatprep.subr.bf16.mxu0 0
    %1741 = vmatpush1.bf16.msra.mxu0 %v1722
    %1742 = vmatprep.subr.bf16.mxu0 0
    %1743 = vmatpush1.bf16.msra.mxu0 %v1723
    %1744 = vmatprep.subr.bf16.mxu0 0
    %1745 = vmatpush1.bf16.msra.mxu0 %v1724
    %1746 = vmatprep.subr.bf16.mxu0 0
    %1747 = vmatpush1.bf16.msra.mxu0 %v1725
    %1748 = vmatprep.subr.bf16.mxu0 0
    %1749 = vmatpush1.bf16.msra.mxu0 %v1726
    %1750 = vmatprep.subr.bf16.mxu0 0
    %1751 = vmatpush1.bf16.msra.mxu0 %v1727
    %1752 = vmatprep.subr.bf16.mxu0 0
    %1753 = vmatpush1.bf16.msra.mxu0 0
    %1754 = vmatprep.subr.bf16.mxu0 0
    %1755 = vmatpush1.bf16.msra.mxu0 0
    %1756 = vmatprep.subr.bf16.mxu0 0
    %1757 = vmatpush1.bf16.msra.mxu0 0
    %1758 = vmatprep.subr.bf16.mxu0 0
    %1759 = vmatpush1.bf16.msra.mxu0 0
    %1760 = vmatprep.subr.bf16.mxu0 0
    %1761 = vmatpush1.bf16.msra.mxu0 0
    %1762 = vmatprep.subr.bf16.mxu0 0
    %1763 = vmatpush1.bf16.msra.mxu0 0
    %1764 = vmatprep.subr.bf16.mxu0 0
    %1765 = vmatpush1.bf16.msra.mxu0 0
    %1766 = vmatprep.subr.bf16.mxu0 0
    %1767 = vmatpush1.bf16.msra.mxu0 0
    %1768 = vmatprep.mubr.bf16.mxu0 0
    %1769 = vmatmul.mubr.bf16.gmra.mrb[0].mxu0 %v1664
    %v1770 = vpop.f32.mrb[0].mxu0
    %v1771 = vadd.f32 %v1686, %v1770
    %v1772 = vpop.f32.mrb[0].mxu0
    %v1773 = vpop.f32.mrb[0].mxu0
    %v1774 = vadd.f32 %v1686, %v1773
    %v1775 = vpop.f32.mrb[0].mxu0
    %1776 = vdwg.mxu0
    %v1777 = vadd.f32 %v1563, %v1771
    %v1778 = vadd.f32 %v1564, %v1774
    %1779 = vst.msk [vmem:[#allocation2] sm:$0xff] %vm51, %v1777
    %1780 = vst.msk [vmem:[#allocation2 + $0x8] sm:$0xff] %vm51, %v1778
    // Predicated region
    $region58: #{alibi_confit_block.1} parent=1 // pred_check
      _
    $region59: #{alibi_confit_block.1} parent=1 // pred_check_branch
      %1782 = sbr.rel (0) target = $region61
    $region60: #{alibi_confit_block.1} parent=1 // pred_region
      %s1784 = ssub.s32 256, 256
      %1785 = vsyncadd [#allocation3], %s1784
      %s1786 = sshll.u32 [#allocation2], 4
      %s1787 = int_to_ptr.vmem [resolvable:$true] %s1786
      %1792 = dma.vmem_to_hbm [thread:$0]  %s1787, 256, %s14, [#allocation3], 128, 128, 8
    $region61: #{alibi_confit_block.1} parent=1 // pred_fallthru
      _
    // Predicated region
    $region62: #{alibi_confit_block.1} parent=1 // pred_check
      _
    $region63: #{alibi_confit_block.1} parent=1 // pred_check_branch
      %1794 = sbr.rel (0) target = $region65
    $region64: #{alibi_confit_block.1} parent=1 // pred_region
      %1795 = dma.done [#allocation3], 256
    $region65: #{alibi_confit_block.1} parent=1 // pred_fallthru
      _
    %1796 = vsyncpa [#allocation3], 1

</llo_original>
